<compile_context>
chip_gen: v7x
topology: tpu7x:2x2x1
jax: 0.10.0
libtpu: 0.0.40
codegen_flags: <defaults>
</compile_context>

<pallas_src>
import math
from functools import lru_cache, partial

import jax
import jax.numpy as jnp
from jax import lax
from jax.experimental import pallas as pl
from jax.experimental.pallas import tpu as pltpu


# ---------------------------------------------------------------------------
# Hardware-derived VMEM budgeting
# ---------------------------------------------------------------------------
def _vmem_capacity_bytes():
    try:
        return int(pltpu.get_tpu_info().vmem_capacity_bytes)
    except Exception:
        # Query unavailable: assume the smallest per-TensorCore capacity (v7x, 64 MiB).
        return 64 * 1024 * 1024


def _weight_bytes(C):
    # 4 bf16 (C, C) weights + 4 f32 (1, C) biases.
    return 4 * C * C * 2 + 4 * C * 4


def _per_batch_row_bytes(T, C, n_heads):
    # Attention-core working set for ONE batch row:
    #   f32 scores + bf16 probs: N*T*T*(4+2)
    #   q/k/v/att f32 + bf16 copies, x/out blocks: ~40 * T * C
    return n_heads * T * T * 6 + T * C * 40


def _choose_batch_block(B, T, C, n_heads, vmem_cap):
    per_row = _per_batch_row_bytes(T, C, n_heads)
    budget = vmem_cap - 2 * _weight_bytes(C) - (8 << 20)
    bb_max = max(1, budget // (2 * per_row))          # x/out blocks are double-buffered
    if B >= 2:
        bb_max = min(bb_max, B // 2)                  # keep grid extent >= 2 (v7x: both TCs)
    bb = 1
    for d in range(1, min(int(bb_max), B) + 1):
        if B % d == 0:
            bb = d
    return bb


# ---------------------------------------------------------------------------
# Pallas kernel: fused attention for a block of Bb batch rows.
# ---------------------------------------------------------------------------
def _make_attention_kernel(Bb, T, C, n_heads):
    N = n_heads
    D = C // N
    M = Bb * T          # GEMM M dimension
    G = Bb * N          # batched-contraction batch dimension

    def kernel(x_ref, wq_ref, wk_ref, wv_ref, wp_ref,
               bq_ref, bk_ref, bv_ref, bp_ref, o_ref):
        # x arrives in bf16 (halved HBM->VMEM DMA); flatten the batch block into the GEMM
        # M dimension so the projection matmuls fill the MXU.
        x = x_ref[...].reshape(M, C)                                    # (Bb*T, C) bf16

        # q/k/v projections: (Bb*T, C) @ (C, C), f32 accumulation on the MXU.
        # 1/sqrt(D) is pre-folded into wq / bq on the host.
        q = jnp.dot(x, wq_ref[...], preferred_element_type=jnp.float32) + bq_ref[...]
        k = jnp.dot(x, wk_ref[...], preferred_element_type=jnp.float32) + bk_ref[...]
        v = jnp.dot(x, wv_ref[...], preferred_element_type=jnp.float32) + bv_ref[...]

        # (Bb*T, C) -> (Bb*N, T, D): cast to bf16 BEFORE the relayout (halves the bytes
        # moved through the XLU / vld-vst slots; bf16 is needed for the next MXU op anyway).
        def to_heads(a):
            return (a.astype(jnp.bfloat16)
                     .reshape(Bb, T, N, D)
                     .transpose(0, 2, 1, 3)
                     .reshape(G, T, D))

        q3, k3, v3 = to_heads(q), to_heads(k), to_heads(v)

        # Scores: one batched contraction over D (no materialized k^T / per-head slices).
        s = jnp.einsum("gtd,gsd->gts", q3, k3,
                       preferred_element_type=jnp.float32)               # (G, T, T) f32

        # Causal mask == torch.tril(ones)[:T, :T].
        row = lax.broadcasted_iota(jnp.int32, (T, T), 0)
        col = lax.broadcasted_iota(jnp.int32, (T, T), 1)
        s = jnp.where((row >= col)[None, :, :], s, -jnp.inf)

        # Softmax in f32; normalisation deferred to the (G, T, D) output.
        m = jnp.max(s, axis=-1, keepdims=True)
        p = jnp.exp(s - m)                                               # unnormalised probs
        denom = jnp.sum(p, axis=-1, keepdims=True)                       # (G, T, 1)

        att = jnp.einsum("gts,gsd->gtd", p.astype(jnp.bfloat16), v3,
                         preferred_element_type=jnp.float32)             # (G, T, D) f32
        # Exact reciprocal (only G*T elements) for tighter numerics than the approx path.
        att = att * (1.0 / denom)

        # (G, T, D) -> (Bb*T, C): bf16 BEFORE the relayout, then one lane-dense slab feeds
        # the output projection (equivalent to attention.transpose(1,2).reshape(B,T,N*D)).
        att = (att.astype(jnp.bfloat16)
                  .reshape(Bb, N, T, D)
                  .transpose(0, 2, 1, 3)
                  .reshape(M, C))

        out = jnp.dot(att, wp_ref[...], preferred_element_type=jnp.float32) + bp_ref[...]
        o_ref[...] = out.reshape(Bb, T, C).astype(o_ref.dtype)

    return kernel


# ---------------------------------------------------------------------------
# pallas_call builder (cached per shape) + wrapper
# ---------------------------------------------------------------------------
@lru_cache(maxsize=None)
def _build_attention_call(B, T, C, n_heads, single_buffer_consts):
    vmem_cap = _vmem_capacity_bytes()
    Bb = _choose_batch_block(B, T, C, n_heads, vmem_cap)
    kernel = _make_attention_kernel(Bb, T, C, n_heads)

    x_spec = pl.BlockSpec((Bb, T, C), lambda b: (b, 0, 0))
    if single_buffer_consts:
        # Weights/biases have a constant index_map: double-buffering only doubles their
        # VMEM residency, so request a single buffer.
        w_spec = pl.BlockSpec((C, C), lambda b: (0, 0), pipeline_mode=pl.Buffered(1))
        b_spec = pl.BlockSpec((1, C), lambda b: (0, 0), pipeline_mode=pl.Buffered(1))
    else:
        w_spec = pl.BlockSpec((C, C), lambda b: (0, 0))
        b_spec = pl.BlockSpec((1, C), lambda b: (0, 0))

    # Scoped-VMEM request sized from the live set, clamped to the chip capacity minus
    # headroom (v5e/v6e: 128 MiB, v7x: 64 MiB per TensorCore).
    wbytes = _weight_bytes(C) * (1 if single_buffer_consts else 2)
    want = wbytes + 2 * Bb * _per_batch_row_bytes(T, C, n_heads) + (4 << 20)
    vmem_limit = int(min(max(32 << 20, want), max(32 << 20, vmem_cap - (12 << 20))))

    return pl.pallas_call(
        kernel,
        out_shape=jax.ShapeDtypeStruct((B, T, C), jnp.float32),
        grid_spec=pltpu.PrefetchScalarGridSpec(
            num_scalar_prefetch=0,
            grid=(B // Bb,),
            in_specs=[x_spec, w_spec, w_spec, w_spec, w_spec,
                      b_spec, b_spec, b_spec, b_spec],
            out_specs=pl.BlockSpec((Bb, T, C), lambda b: (b, 0, 0)),
        ),
        compiler_params=pltpu.CompilerParams(
            dimension_semantics=("parallel",),   # batch-block axis feeds both v7x TCs
            vmem_limit_bytes=vmem_limit,
        ),
    )


def prepare_params(params, n_heads):
    """Host-side, once at model init: transpose Linear weights to (in, out), fold the
    1/sqrt(D) attention scale into the q projection (weight AND bias), cast GEMM
    operands to bf16."""
    C = params["wq"].shape[0]
    D = C // n_heads
    scale = 1.0 / math.sqrt(D)
    wq = (params["wq"].T * scale).astype(jnp.bfloat16)
    wk = params["wk"].T.astype(jnp.bfloat16)
    wv = params["wv"].T.astype(jnp.bfloat16)
    wp = params["wp"].T.astype(jnp.bfloat16)
    bq = (params["bq"] * scale).reshape(1, C).astype(jnp.float32)
    bk = params["bk"].reshape(1, C).astype(jnp.float32)
    bv = params["bv"].reshape(1, C).astype(jnp.float32)
    bp = params["bp"].reshape(1, C).astype(jnp.float32)
    return (wq, wk, wv, wp, bq, bk, bv, bp)


@partial(jax.jit, static_argnums=(2, 3))
def _forward(x, prepared, n_heads, single_buffer_consts):
    B, T, C = x.shape
    fn = _build_attention_call(B, T, C, n_heads, single_buffer_consts)
    # bf16 input halves the HBM->VMEM DMA for x; output stays f32 (module semantics).
    return fn(x.astype(jnp.bfloat16), *prepared)


def masked_causal_attention(x, prepared, n_heads):
    """Forward pass of MaskedCausalAttention (eval mode; drop_p treated as 0).

    x: (B, T, C) float32. `prepared`: output of prepare_params(). Returns (B, T, C) f32.
    Dispatch is async (no block_until_ready here); the pallas_call is built once per
    shape and jit-cached.
    """
    try:
        return _forward(x, prepared, n_heads, True)
    except (TypeError, NotImplementedError, pltpu.LoweringException):
        # pl.Buffered(1) not supported by this jax/Mosaic build: fall back to default
        # double-buffered constant operands (bf16 weights already halve their residency).
        return _forward(x, prepared, n_heads, False)


# ---------------------------------------------------------------------------
# Deterministic parameter init (mirrors MaskedCausalAttention.init_weights)
# ---------------------------------------------------------------------------
def init_params(key, h_dim):
    scale = 1.0 / math.sqrt(h_dim)
    keys = jax.random.split(key, 4)
    params = {}
    for name, k in zip(["q", "k", "v", "p"], keys):
        params[f"w{name}"] = scale * jax.random.normal(k, (h_dim, h_dim), jnp.float32)
        params[f"b{name}"] = jnp.zeros((h_dim,), jnp.float32)
    return params


# ---------------------------------------------------------------------------
# Pure-JAX f32 reference (correctness sanity check)
# ---------------------------------------------------------------------------
def reference(x, params, n_heads):
    B, T, C = x.shape
    D = C // n_heads
    q = x @ params["wq"].T + params["bq"]
    k = x @ params["wk"].T + params["bk"]
    v = x @ params["wv"].T + params["bv"]
    q = q.reshape(B, T, n_heads, D).transpose(0, 2, 1, 3)
    k = k.reshape(B, T, n_heads, D).transpose(0, 2, 1, 3)
    v = v.reshape(B, T, n_heads, D).transpose(0, 2, 1, 3)
    w = jnp.einsum("bhqd,bhkd->bhqk", q, k) / math.sqrt(D)
    mask = jnp.tril(jnp.ones((T, T), bool))
    w = jnp.where(mask[None, None], w, -jnp.inf)
    p = jax.nn.softmax(w, axis=-1)
    att = jnp.einsum("bhqk,bhkd->bhqd", p, v)
    att = att.transpose(0, 2, 1, 3).reshape(B, T, C)
    return att @ params["wp"].T + params["bp"]


if __name__ == "__main__":
    B, T, C, n_heads = 2, 8, 32, 4   # max_T >= T; drop_p = 0.0 (eval / identity dropout)

    key = jax.random.PRNGKey(0)
    kx, kp = jax.random.split(key)
    x = jax.random.normal(kx, (B, T, C), jnp.float32)
    params = init_params(kp, C)
    prepared = prepare_params(params, n_heads)   # hoisted weight prep (done once)

    out = masked_causal_attention(x, prepared, n_heads)
    out = jax.block_until_ready(out)

    ref = reference(x, params, n_heads)
    # Kernel uses bf16 matmul inputs (f32 accumulation) + exact softmax normalisation, so
    # the tolerance vs the pure-f32 reference reflects bf16 rounding only.
    err = float(jnp.max(jnp.abs(out - ref)))
    assert jnp.allclose(out, ref, atol=5e-2, rtol=5e-2), (
        f"mismatch vs reference (max abs err {err})")

    print("KERNEL_OK")
</pallas_src>

<mosaic_0001>
module attributes {stable_mosaic.version = 11 : i64} {
  func.func @kernel(%arg0: i32, %arg1: memref<1x8x32xbf16, #tpu.memory_space<vmem>>, %arg2: memref<32x32xbf16, #tpu.memory_space<vmem>>, %arg3: memref<32x32xbf16, #tpu.memory_space<vmem>>, %arg4: memref<32x32xbf16, #tpu.memory_space<vmem>>, %arg5: memref<32x32xbf16, #tpu.memory_space<vmem>>, %arg6: memref<1x32xf32, #tpu.memory_space<vmem>>, %arg7: memref<1x32xf32, #tpu.memory_space<vmem>>, %arg8: memref<1x32xf32, #tpu.memory_space<vmem>>, %arg9: memref<1x32xf32, #tpu.memory_space<vmem>>, %arg10: memref<1x8x32xf32, #tpu.memory_space<vmem>>) attributes {dimension_semantics = [#tpu.dimension_semantics<parallel>], iteration_bounds = array<i64: 2>, scalar_prefetch = 0 : i64, scratch_operands = 0 : i64, tpu.core_type = #tpu.core_type<tc>, window_params = [{transform_indices = @transform_0, window_bounds = array<i64: 1, 8, 32>}, {pipeline_mode = #tpu.pipeline_mode<synchronous>, transform_indices = @transform_1, window_bounds = array<i64: 32, 32>}, {pipeline_mode = #tpu.pipeline_mode<synchronous>, transform_indices = @transform_2, window_bounds = array<i64: 32, 32>}, {pipeline_mode = #tpu.pipeline_mode<synchronous>, transform_indices = @transform_3, window_bounds = array<i64: 32, 32>}, {pipeline_mode = #tpu.pipeline_mode<synchronous>, transform_indices = @transform_4, window_bounds = array<i64: 32, 32>}, {pipeline_mode = #tpu.pipeline_mode<synchronous>, transform_indices = @transform_5, window_bounds = array<i64: 1, 32>}, {pipeline_mode = #tpu.pipeline_mode<synchronous>, transform_indices = @transform_6, window_bounds = array<i64: 1, 32>}, {pipeline_mode = #tpu.pipeline_mode<synchronous>, transform_indices = @transform_7, window_bounds = array<i64: 1, 32>}, {pipeline_mode = #tpu.pipeline_mode<synchronous>, transform_indices = @transform_8, window_bounds = array<i64: 1, 32>}, {transform_indices = @transform_9, window_bounds = array<i64: 1, 8, 32>}]} {
    %c0 = arith.constant 0 : index
    %c0_0 = arith.constant 0 : index
    %c0_1 = arith.constant 0 : index
    %0 = vector.load %arg1[%c0, %c0_0, %c0_1] : memref<1x8x32xbf16, #tpu.memory_space<vmem>>, vector<1x8x32xbf16>
    %1 = vector.shape_cast %0 : vector<1x8x32xbf16> to vector<8x32xbf16>
    %c0_2 = arith.constant 0 : index
    %c0_3 = arith.constant 0 : index
    %2 = vector.load %arg2[%c0_2, %c0_3] : memref<32x32xbf16, #tpu.memory_space<vmem>>, vector<32x32xbf16>
    %cst = arith.constant dense<0.000000e+00> : vector<8x32xf32>
    %3 = tpu.matmul %1, %2, %cst {dimension_numbers = #tpu.dot_dimension_numbers<[1], [0], [0], [1], [0, 0, 1, 1], [], []>} : vector<8x32xbf16>, vector<32x32xbf16>, vector<8x32xf32> -> vector<8x32xf32>
    %c0_4 = arith.constant 0 : index
    %c0_5 = arith.constant 0 : index
    %4 = vector.load %arg6[%c0_4, %c0_5] : memref<1x32xf32, #tpu.memory_space<vmem>>, vector<1x32xf32>
    %5 = vector.broadcast %4 : vector<1x32xf32> to vector<8x32xf32>
    %6 = arith.addf %3, %5 : vector<8x32xf32>
    %c0_6 = arith.constant 0 : index
    %c0_7 = arith.constant 0 : index
    %7 = vector.load %arg3[%c0_6, %c0_7] : memref<32x32xbf16, #tpu.memory_space<vmem>>, vector<32x32xbf16>
    %cst_8 = arith.constant dense<0.000000e+00> : vector<8x32xf32>
    %8 = tpu.matmul %1, %7, %cst_8 {dimension_numbers = #tpu.dot_dimension_numbers<[1], [0], [0], [1], [0, 0, 1, 1], [], []>} : vector<8x32xbf16>, vector<32x32xbf16>, vector<8x32xf32> -> vector<8x32xf32>
    %c0_9 = arith.constant 0 : index
    %c0_10 = arith.constant 0 : index
    %9 = vector.load %arg7[%c0_9, %c0_10] : memref<1x32xf32, #tpu.memory_space<vmem>>, vector<1x32xf32>
    %10 = vector.broadcast %9 : vector<1x32xf32> to vector<8x32xf32>
    %11 = arith.addf %8, %10 : vector<8x32xf32>
    %c0_11 = arith.constant 0 : index
    %c0_12 = arith.constant 0 : index
    %12 = vector.load %arg4[%c0_11, %c0_12] : memref<32x32xbf16, #tpu.memory_space<vmem>>, vector<32x32xbf16>
    %cst_13 = arith.constant dense<0.000000e+00> : vector<8x32xf32>
    %13 = tpu.matmul %1, %12, %cst_13 {dimension_numbers = #tpu.dot_dimension_numbers<[1], [0], [0], [1], [0, 0, 1, 1], [], []>} : vector<8x32xbf16>, vector<32x32xbf16>, vector<8x32xf32> -> vector<8x32xf32>
    %c0_14 = arith.constant 0 : index
    %c0_15 = arith.constant 0 : index
    %14 = vector.load %arg8[%c0_14, %c0_15] : memref<1x32xf32, #tpu.memory_space<vmem>>, vector<1x32xf32>
    %15 = vector.broadcast %14 : vector<1x32xf32> to vector<8x32xf32>
    %16 = arith.addf %13, %15 : vector<8x32xf32>
    %17 = arith.truncf %6 : vector<8x32xf32> to vector<8x32xbf16>
    %18 = vector.shape_cast %17 : vector<8x32xbf16> to vector<1x8x4x8xbf16>
    %19 = tpu.transpose %18, [0, 2, 1, 3] : vector<1x8x4x8xbf16> -> vector<1x4x8x8xbf16>
    %20 = vector.shape_cast %19 : vector<1x4x8x8xbf16> to vector<4x8x8xbf16>
    %21 = arith.truncf %11 : vector<8x32xf32> to vector<8x32xbf16>
    %22 = vector.shape_cast %21 : vector<8x32xbf16> to vector<1x8x4x8xbf16>
    %23 = tpu.transpose %22, [0, 2, 1, 3] : vector<1x8x4x8xbf16> -> vector<1x4x8x8xbf16>
    %24 = vector.shape_cast %23 : vector<1x4x8x8xbf16> to vector<4x8x8xbf16>
    %25 = arith.truncf %16 : vector<8x32xf32> to vector<8x32xbf16>
    %26 = vector.shape_cast %25 : vector<8x32xbf16> to vector<1x8x4x8xbf16>
    %27 = tpu.transpose %26, [0, 2, 1, 3] : vector<1x8x4x8xbf16> -> vector<1x4x8x8xbf16>
    %28 = vector.shape_cast %27 : vector<1x4x8x8xbf16> to vector<4x8x8xbf16>
    "tpu.trace_start"() <{level = 10 : i32, message = "gtd,gsd->gts"}> : () -> ()
    %cst_16 = arith.constant dense<0.000000e+00> : vector<4x8x8xf32>
    %29 = tpu.matmul %20, %24, %cst_16 {dimension_numbers = #tpu.dot_dimension_numbers<[2], [2], [1], [1], [0, 0, 0, 1, 1, 1], [0], [0]>} : vector<4x8x8xbf16>, vector<4x8x8xbf16>, vector<4x8x8xf32> -> vector<4x8x8xf32>
    "tpu.trace_stop"() : () -> ()
    %30 = tpu.iota {dimensions = array<i32: 0>} : vector<8x8xi32>
    %31 = tpu.iota {dimensions = array<i32: 1>} : vector<8x8xi32>
    %32 = arith.cmpi sge, %30, %31 : vector<8x8xi32>
    %33 = vector.shape_cast %32 : vector<8x8xi1> to vector<1x8x8xi1>
    %cst_17 = arith.constant 0xFF800000 : f32
    %34 = vector.shape_cast %33 : vector<1x8x8xi1> to vector<1x8x8xi1>
    %35 = vector.broadcast %34 : vector<1x8x8xi1> to vector<4x8x8xi1>
    %36 = vector.broadcast %cst_17 : f32 to vector<4x8x8xf32>
    %37 = arith.select %35, %29, %36 : vector<4x8x8xi1>, vector<4x8x8xf32>
    %cst_18 = arith.constant dense<0xFF800000> : vector<4x8xf32>
    %38 = vector.multi_reduction <maximumf>, %37, %cst_18 [2] : vector<4x8x8xf32> to vector<4x8xf32>
    %39 = vector.shape_cast %38 : vector<4x8xf32> to vector<4x8x1xf32>
    %40 = vector.broadcast %39 : vector<4x8x1xf32> to vector<4x8x8xf32>
    %41 = arith.subf %37, %40 : vector<4x8x8xf32>
    %42 = math.exp %41 : vector<4x8x8xf32>
    %cst_19 = arith.constant dense<0.000000e+00> : vector<4x8xf32>
    %43 = vector.multi_reduction <add>, %42, %cst_19 [2] : vector<4x8x8xf32> to vector<4x8xf32>
    %44 = vector.shape_cast %43 : vector<4x8xf32> to vector<4x8x1xf32>
    %45 = arith.truncf %42 : vector<4x8x8xf32> to vector<4x8x8xbf16>
    "tpu.trace_start"() <{level = 10 : i32, message = "gts,gsd->gtd"}> : () -> ()
    %cst_20 = arith.constant dense<0.000000e+00> : vector<4x8x8xf32>
    %46 = tpu.matmul %45, %28, %cst_20 {dimension_numbers = #tpu.dot_dimension_numbers<[2], [1], [1], [2], [0, 0, 0, 1, 1, 2], [0], [0]>} : vector<4x8x8xbf16>, vector<4x8x8xbf16>, vector<4x8x8xf32> -> vector<4x8x8xf32>
    "tpu.trace_stop"() : () -> ()
    %cst_21 = arith.constant 1.000000e+00 : f32
    %47 = vector.broadcast %cst_21 : f32 to vector<4x8x1xf32>
    %48 = arith.divf %47, %44 : vector<4x8x1xf32>
    %49 = vector.broadcast %48 : vector<4x8x1xf32> to vector<4x8x8xf32>
    %50 = arith.mulf %46, %49 : vector<4x8x8xf32>
    %51 = arith.truncf %50 : vector<4x8x8xf32> to vector<4x8x8xbf16>
    %52 = vector.shape_cast %51 : vector<4x8x8xbf16> to vector<1x4x8x8xbf16>
    %53 = tpu.transpose %52, [0, 2, 1, 3] : vector<1x4x8x8xbf16> -> vector<1x8x4x8xbf16>
    %54 = vector.shape_cast %53 : vector<1x8x4x8xbf16> to vector<8x32xbf16>
    %c0_22 = arith.constant 0 : index
    %c0_23 = arith.constant 0 : index
    %55 = vector.load %arg5[%c0_22, %c0_23] : memref<32x32xbf16, #tpu.memory_space<vmem>>, vector<32x32xbf16>
    %cst_24 = arith.constant dense<0.000000e+00> : vector<8x32xf32>
    %56 = tpu.matmul %54, %55, %cst_24 {dimension_numbers = #tpu.dot_dimension_numbers<[1], [0], [0], [1], [0, 0, 1, 1], [], []>} : vector<8x32xbf16>, vector<32x32xbf16>, vector<8x32xf32> -> vector<8x32xf32>
    %c0_25 = arith.constant 0 : index
    %c0_26 = arith.constant 0 : index
    %57 = vector.load %arg9[%c0_25, %c0_26] : memref<1x32xf32, #tpu.memory_space<vmem>>, vector<1x32xf32>
    %58 = vector.broadcast %57 : vector<1x32xf32> to vector<8x32xf32>
    %59 = arith.addf %56, %58 : vector<8x32xf32>
    %60 = vector.shape_cast %59 : vector<8x32xf32> to vector<1x8x32xf32>
    %c0_27 = arith.constant 0 : index
    %c0_28 = arith.constant 0 : index
    %c0_29 = arith.constant 0 : index
    %61 = vector.load %arg10[%c0_27, %c0_28, %c0_29] : memref<1x8x32xf32, #tpu.memory_space<vmem>>, vector<1x8x32xf32>
    tpu.vector_store %arg10[%c0_27, %c0_28, %c0_29], %60 {strides = array<i32>} : memref<1x8x32xf32, #tpu.memory_space<vmem>>, vector<1x8x32xf32>,
    return
  }
  func.func @transform_0(%arg0: i32) -> (i32, i32, i32) {
    %c0_i32 = arith.constant 0 : i32
    %c0_i32_0 = arith.constant 0 : i32
    %c0_i32_1 = arith.constant 0 : i32
    return %arg0, %c0_i32, %c0_i32_0 : i32, i32, i32
  }
  func.func @transform_1(%arg0: i32) -> (i32, i32) {
    %c0_i32 = arith.constant 0 : i32
    %c0_i32_0 = arith.constant 0 : i32
    %c0_i32_1 = arith.constant 0 : i32
    return %c0_i32, %c0_i32_0 : i32, i32
  }
  func.func @transform_2(%arg0: i32) -> (i32, i32) {
    %c0_i32 = arith.constant 0 : i32
    %c0_i32_0 = arith.constant 0 : i32
    %c0_i32_1 = arith.constant 0 : i32
    return %c0_i32, %c0_i32_0 : i32, i32
  }
  func.func @transform_3(%arg0: i32) -> (i32, i32) {
    %c0_i32 = arith.constant 0 : i32
    %c0_i32_0 = arith.constant 0 : i32
    %c0_i32_1 = arith.constant 0 : i32
    return %c0_i32, %c0_i32_0 : i32, i32
  }
  func.func @transform_4(%arg0: i32) -> (i32, i32) {
    %c0_i32 = arith.constant 0 : i32
    %c0_i32_0 = arith.constant 0 : i32
    %c0_i32_1 = arith.constant 0 : i32
    return %c0_i32, %c0_i32_0 : i32, i32
  }
  func.func @transform_5(%arg0: i32) -> (i32, i32) {
    %c0_i32 = arith.constant 0 : i32
    %c0_i32_0 = arith.constant 0 : i32
    %c0_i32_1 = arith.constant 0 : i32
    return %c0_i32, %c0_i32_0 : i32, i32
  }
  func.func @transform_6(%arg0: i32) -> (i32, i32) {
    %c0_i32 = arith.constant 0 : i32
    %c0_i32_0 = arith.constant 0 : i32
    %c0_i32_1 = arith.constant 0 : i32
    return %c0_i32, %c0_i32_0 : i32, i32
  }
  func.func @transform_7(%arg0: i32) -> (i32, i32) {
    %c0_i32 = arith.constant 0 : i32
    %c0_i32_0 = arith.constant 0 : i32
    %c0_i32_1 = arith.constant 0 : i32
    return %c0_i32, %c0_i32_0 : i32, i32
  }
  func.func @transform_8(%arg0: i32) -> (i32, i32) {
    %c0_i32 = arith.constant 0 : i32
    %c0_i32_0 = arith.constant 0 : i32
    %c0_i32_1 = arith.constant 0 : i32
    return %c0_i32, %c0_i32_0 : i32, i32
  }
  func.func @transform_9(%arg0: i32) -> (i32, i32, i32) {
    %c0_i32 = arith.constant 0 : i32
    %c0_i32_0 = arith.constant 0 : i32
    %c0_i32_1 = arith.constant 0 : i32
    return %arg0, %c0_i32, %c0_i32_0 : i32, i32, i32
  }
}

</mosaic_0001>

<llo_original>
// kernel: _forward.1
$region0: #{_forward.1}
  #allocation0 [shape = 'u32[]', space=smem, size = 0x4, offset = 0x4, fixed_abs, tag = 'smem constant byte address 0x4 - core index']
  #allocation1 [shape = 'u32[144,128]{1,0:T(1,128)}', space=vmem, size = 0x12000, scoped, tag = 'internal scratch']
  %s0 = inlined_call_operand.vmem [shape: bf16[2,8,32], index: 0, kind: input, shape index: {}]
  %s1 = inlined_call_operand.vmem [shape: bf16[32,32], index: 1, kind: input, shape index: {}]
  %s2 = inlined_call_operand.hbm [shape: bf16[32,32], index: 2, kind: input, shape index: {}]
  %s3 = inlined_call_operand.vmem [shape: bf16[32,32], index: 3, kind: input, shape index: {}]
  %s4 = inlined_call_operand.hbm [shape: bf16[32,32], index: 4, kind: input, shape index: {}]
  %s5 = inlined_call_operand.vmem [shape: f32[1,32], index: 5, kind: input, shape index: {}]
  %s6 = inlined_call_operand.vmem [shape: f32[1,32], index: 6, kind: input, shape index: {}]
  %s7 = inlined_call_operand.vmem [shape: f32[1,32], index: 7, kind: input, shape index: {}]
  %s8 = inlined_call_operand.vmem [shape: f32[1,32], index: 8, kind: input, shape index: {}]
  %s9 = inlined_call_operand.hbm [shape: f32[2,8,32], index: 9, kind: output, shape index: {}]
  %s10 = sld [smem:[#allocation0]]
  $region77: #{_forward.1} parent=0
    _
  %s12 = ssub.s32 1, %s10
  %s13 = scalar_select 0, %s12, %s10
  $region1: #{_forward.1} parent=0
    #allocation2 [shape = 'u8[8192]{0}', space=vmem, size = 0x2000, scoped, tag = 'input window, operand 2, single buffered']
    #allocation3 [shape = 's32[2]{0}', space=sflag, size = 0x8, scoped, tag = 'scoped memory for _forward.1']
    #allocation4 [shape = 's32[2]{0}', space=sflag, size = 0x8, scoped, tag = 'scoped memory for _forward.1']
    #allocation5 [shape = 'u8[8192]{0}', space=vmem, size = 0x2000, scoped, tag = 'input window, operand 4, single buffered']
    #allocation6 [shape = 's32[1]{0}', space=sflag, size = 0x4, scoped, tag = 'scoped memory for _forward.1']
    #allocation7 [shape = 'u8[8192]{0}', space=vmem, size = 0x2000, scoped, tag = 'output window, operand 0']
    %14 = vsyncpa [#allocation3], 0
    %15 = vsyncpa [#allocation6], 0
    %16 = vsyncpa [#allocation4], 0
    %s17 = scalar_lea.sflag [#allocation4], 1
    %18 = vsyncpa %s17, 0
    loop: start=0, step=1, limit=4
    $region2: #{_forward.1} parent=1 // loop_pre_header
      _
    $region3: #{_forward.1} parent=1 // loop_header
      %s20 = sphi 0, %s24
      %p21 = scmp.ge.s32.totalorder %s20, 4
      %s30 = sphi 0, %s32
      %s33 = sphi 0, %s30
      %s34 = sphi 0, %s33
      %s50 = sphi 0, %s34
      %s54 = sphi 0, %s54
      %s56 = sphi 0, %s54
      %s57 = sphi 0, %s56
      %s71 = sphi 0, %s57
      %s75 = sphi 0, %s75
      %s77 = sphi 0, %s75
      %s78 = sphi 0, %s77
      %s92 = sphi 0, %s78
      %s96 = sphi 0, %s96
      %s98 = sphi 0, %s96
      %s99 = sphi 0, %s98
      %s113 = sphi 0, %s99
      %s117 = sphi 0, %s117
      %s119 = sphi 0, %s117
      %s120 = sphi 0, %s119
      %s134 = sphi 0, %s120
      %s138 = sphi 0, %s138
      %s140 = sphi 0, %s138
      %s141 = sphi 0, %s140
      %s155 = sphi 0, %s141
      %s159 = sphi 0, %s159
      %s161 = sphi 0, %s159
      %s162 = sphi 0, %s161
      %s176 = sphi 0, %s162
      %s180 = sphi 0, %s180
      %s182 = sphi 0, %s180
      %s183 = sphi 0, %s182
      %s197 = sphi 0, %s183
      %s201 = sphi 0, %s201
      %s203 = sphi 0, %s201
      %s204 = sphi 0, %s203
      %s218 = sphi 0, %s204
      %s224 = sphi 0, %s226
      %s227 = sphi 0, %s224
      %s228 = sphi 0, %s227
      %s244 = sphi 0, %s228
    $region4: #{_forward.1} parent=1 // loop_header_branch
      %23 = sbr.rel (%p21) target = $region8
    $region5: #{_forward.1} parent=1 // loop_body
      %s25 = ssub.s32 %s20, 1
      %s26 = ssub.s32 %s20, 2
      %s27 = sadd.s32 %s20, 1
      %s28 = ssub.s32 %s20, %s27
      %p29 = scmp.eq.s32.totalorder %s28, 0
      %s31 = sadd.s32 %s30, 1
      %s32 = scalar_select %p29, %s30, %s31
      %p35 = pneg %p29
      %p36 = scmp.eq.s32.totalorder %s20, 1
      %p37 = por %p35, %p36
      %p38 = scmp.ne.s32.totalorder %s30, %s33
      %p39 = scmp.eq.s32.totalorder %s20, 0
      %p40 = por %p38, %p39
      %p41 = scmp.ne.s32.totalorder %s30, %s33
      %p42 = scmp.eq.s32.totalorder %s25, 1
      %p43 = por %p41, %p42
      %p44 = scmp.ne.s32.totalorder %s33, %s34
      %p45 = scmp.eq.s32.totalorder %s25, 0
      %p46 = por %p44, %p45
      %p47 = scmp.ne.s32.totalorder %s33, %s34
      %p48 = scmp.eq.s32.totalorder %s26, 1
      %p49 = por %p47, %p48
      %p51 = scmp.ne.s32.totalorder %s34, %s50
      %p52 = scmp.eq.s32.totalorder %s26, 0
      %p53 = por %p51, %p52
      %s55 = sadd.s32 %s54, 1
      %p58 = scmp.eq.s32.totalorder %s20, 1
      %p59 = scmp.ne.s32.totalorder %s54, %s56
      %p60 = scmp.eq.s32.totalorder %s20, 0
      %p61 = por %p59, %p60
      %p62 = scmp.ne.s32.totalorder %s54, %s56
      %p63 = scmp.eq.s32.totalorder %s25, 1
      %p64 = por %p62, %p63
      %p65 = scmp.ne.s32.totalorder %s56, %s57
      %p66 = scmp.eq.s32.totalorder %s25, 0
      %p67 = por %p65, %p66
      %p68 = scmp.ne.s32.totalorder %s56, %s57
      %p69 = scmp.eq.s32.totalorder %s26, 1
      %p70 = por %p68, %p69
      %p72 = scmp.ne.s32.totalorder %s57, %s71
      %p73 = scmp.eq.s32.totalorder %s26, 0
      %p74 = por %p72, %p73
      %s76 = sadd.s32 %s75, 1
      %p79 = scmp.eq.s32.totalorder %s20, 1
      %p80 = scmp.ne.s32.totalorder %s75, %s77
      %p81 = scmp.eq.s32.totalorder %s20, 0
      %p82 = por %p80, %p81
      %p83 = scmp.ne.s32.totalorder %s75, %s77
      %p84 = scmp.eq.s32.totalorder %s25, 1
      %p85 = por %p83, %p84
      %p86 = scmp.ne.s32.totalorder %s77, %s78
      %p87 = scmp.eq.s32.totalorder %s25, 0
      %p88 = por %p86, %p87
      %p89 = scmp.ne.s32.totalorder %s77, %s78
      %p90 = scmp.eq.s32.totalorder %s26, 1
      %p91 = por %p89, %p90
      %p93 = scmp.ne.s32.totalorder %s78, %s92
      %p94 = scmp.eq.s32.totalorder %s26, 0
      %p95 = por %p93, %p94
      %s97 = sadd.s32 %s96, 1
      %p100 = scmp.eq.s32.totalorder %s20, 1
      %p101 = scmp.ne.s32.totalorder %s96, %s98
      %p102 = scmp.eq.s32.totalorder %s20, 0
      %p103 = por %p101, %p102
      %p104 = scmp.ne.s32.totalorder %s96, %s98
      %p105 = scmp.eq.s32.totalorder %s25, 1
      %p106 = por %p104, %p105
      %p107 = scmp.ne.s32.totalorder %s98, %s99
      %p108 = scmp.eq.s32.totalorder %s25, 0
      %p109 = por %p107, %p108
      %p110 = scmp.ne.s32.totalorder %s98, %s99
      %p111 = scmp.eq.s32.totalorder %s26, 1
      %p112 = por %p110, %p111
      %p114 = scmp.ne.s32.totalorder %s99, %s113
      %p115 = scmp.eq.s32.totalorder %s26, 0
      %p116 = por %p114, %p115
      %s118 = sadd.s32 %s117, 1
      %p121 = scmp.eq.s32.totalorder %s20, 1
      %p122 = scmp.ne.s32.totalorder %s117, %s119
      %p123 = scmp.eq.s32.totalorder %s20, 0
      %p124 = por %p122, %p123
      %p125 = scmp.ne.s32.totalorder %s117, %s119
      %p126 = scmp.eq.s32.totalorder %s25, 1
      %p127 = por %p125, %p126
      %p128 = scmp.ne.s32.totalorder %s119, %s120
      %p129 = scmp.eq.s32.totalorder %s25, 0
      %p130 = por %p128, %p129
      %p131 = scmp.ne.s32.totalorder %s119, %s120
      %p132 = scmp.eq.s32.totalorder %s26, 1
      %p133 = por %p131, %p132
      %p135 = scmp.ne.s32.totalorder %s120, %s134
      %p136 = scmp.eq.s32.totalorder %s26, 0
      %p137 = por %p135, %p136
      %s139 = sadd.s32 %s138, 1
      %p142 = scmp.eq.s32.totalorder %s20, 1
      %p143 = scmp.ne.s32.totalorder %s138, %s140
      %p144 = scmp.eq.s32.totalorder %s20, 0
      %p145 = por %p143, %p144
      %p146 = scmp.ne.s32.totalorder %s138, %s140
      %p147 = scmp.eq.s32.totalorder %s25, 1
      %p148 = por %p146, %p147
      %p149 = scmp.ne.s32.totalorder %s140, %s141
      %p150 = scmp.eq.s32.totalorder %s25, 0
      %p151 = por %p149, %p150
      %p152 = scmp.ne.s32.totalorder %s140, %s141
      %p153 = scmp.eq.s32.totalorder %s26, 1
      %p154 = por %p152, %p153
      %p156 = scmp.ne.s32.totalorder %s141, %s155
      %p157 = scmp.eq.s32.totalorder %s26, 0
      %p158 = por %p156, %p157
      %s160 = sadd.s32 %s159, 1
      %p163 = scmp.eq.s32.totalorder %s20, 1
      %p164 = scmp.ne.s32.totalorder %s159, %s161
      %p165 = scmp.eq.s32.totalorder %s20, 0
      %p166 = por %p164, %p165
      %p167 = scmp.ne.s32.totalorder %s159, %s161
      %p168 = scmp.eq.s32.totalorder %s25, 1
      %p169 = por %p167, %p168
      %p170 = scmp.ne.s32.totalorder %s161, %s162
      %p171 = scmp.eq.s32.totalorder %s25, 0
      %p172 = por %p170, %p171
      %p173 = scmp.ne.s32.totalorder %s161, %s162
      %p174 = scmp.eq.s32.totalorder %s26, 1
      %p175 = por %p173, %p174
      %p177 = scmp.ne.s32.totalorder %s162, %s176
      %p178 = scmp.eq.s32.totalorder %s26, 0
      %p179 = por %p177, %p178
      %s181 = sadd.s32 %s180, 1
      %p184 = scmp.eq.s32.totalorder %s20, 1
      %p185 = scmp.ne.s32.totalorder %s180, %s182
      %p186 = scmp.eq.s32.totalorder %s20, 0
      %p187 = por %p185, %p186
      %p188 = scmp.ne.s32.totalorder %s180, %s182
      %p189 = scmp.eq.s32.totalorder %s25, 1
      %p190 = por %p188, %p189
      %p191 = scmp.ne.s32.totalorder %s182, %s183
      %p192 = scmp.eq.s32.totalorder %s25, 0
      %p193 = por %p191, %p192
      %p194 = scmp.ne.s32.totalorder %s182, %s183
      %p195 = scmp.eq.s32.totalorder %s26, 1
      %p196 = por %p194, %p195
      %p198 = scmp.ne.s32.totalorder %s183, %s197
      %p199 = scmp.eq.s32.totalorder %s26, 0
      %p200 = por %p198, %p199
      %s202 = sadd.s32 %s201, 1
      %p205 = scmp.eq.s32.totalorder %s20, 1
      %p206 = scmp.ne.s32.totalorder %s201, %s203
      %p207 = scmp.eq.s32.totalorder %s20, 0
      %p208 = por %p206, %p207
      %p209 = scmp.ne.s32.totalorder %s201, %s203
      %p210 = scmp.eq.s32.totalorder %s25, 1
      %p211 = por %p209, %p210
      %p212 = scmp.ne.s32.totalorder %s203, %s204
      %p213 = scmp.eq.s32.totalorder %s25, 0
      %p214 = por %p212, %p213
      %p215 = scmp.ne.s32.totalorder %s203, %s204
      %p216 = scmp.eq.s32.totalorder %s26, 1
      %p217 = por %p215, %p216
      %p219 = scmp.ne.s32.totalorder %s204, %s218
      %p220 = scmp.eq.s32.totalorder %s26, 0
      %p221 = por %p219, %p220
      %s222 = ssub.s32 %s20, %s27
      %p223 = scmp.eq.s32.totalorder %s222, 0
      %s225 = sadd.s32 %s224, 1
      %s226 = scalar_select %p223, %s224, %s225
      %p229 = pneg %p223
      %p230 = scmp.eq.s32.totalorder %s20, 1
      %p231 = por %p229, %p230
      %p232 = scmp.ne.s32.totalorder %s224, %s227
      %p233 = scmp.eq.s32.totalorder %s20, 0
      %p234 = por %p232, %p233
      %p235 = scmp.ne.s32.totalorder %s224, %s227
      %p236 = scmp.eq.s32.totalorder %s25, 1
      %p237 = por %p235, %p236
      %p238 = scmp.ne.s32.totalorder %s227, %s228
      %p239 = scmp.eq.s32.totalorder %s25, 0
      %p240 = por %p238, %p239
      %p241 = scmp.ne.s32.totalorder %s227, %s228
      %p242 = scmp.eq.s32.totalorder %s26, 1
      %p243 = por %p241, %p242
      %p245 = scmp.ne.s32.totalorder %s228, %s244
      %p246 = scmp.eq.s32.totalorder %s26, 0
      %p247 = por %p245, %p246
      %p248 = scmp.le.s32.totalorder 1, %s20
      %p249 = scmp.lt.s32.totalorder %s20, 3
      %p250 = pnand %p248, %p249
      %p251 = pneg %p250
      // Predicated region
      $region9: #{_forward.1} parent=5 // pred_check
        _
      $region10: #{_forward.1} parent=5 // pred_check_branch
        %253 = sbr.rel (%p250) target = $region12
      $region11: #{_forward.1} parent=5 // pred_region
        %s254 = ssub.s32 %s20, 1
        // Predicated region
        $region13: #{_forward.1} parent=11 // pred_check
          %p255 = pneg %p67
        $region14: #{_forward.1} parent=11 // pred_check_branch
          %257 = sbr.rel (%p255) target = $region16
        $region15: #{_forward.1} parent=11 // pred_region
          _
        $region16: #{_forward.1} parent=11 // pred_fallthru
          _
        // Predicated region
        $region17: #{_forward.1} parent=11 // pred_check
          %p258 = pneg %p88
        $region18: #{_forward.1} parent=11 // pred_check_branch
          %260 = sbr.rel (%p258) target = $region20
        $region19: #{_forward.1} parent=11 // pred_region
          %s262 = ssub.s32 256, 256
          %263 = vsyncadd [#allocation3], %s262
          %s264 = sshll.u32 [#allocation2], 4
          %s265 = int_to_ptr.vmem [resolvable:$true] %s264
          %270 = dma.hbm_to_vmem [thread:$0]  %s2, 256, %s265, [#allocation3], 64, 64, 4
        $region20: #{_forward.1} parent=11 // pred_fallthru
          _
        // Predicated region
        $region21: #{_forward.1} parent=11 // pred_check
          %p271 = pneg %p109
        $region22: #{_forward.1} parent=11 // pred_check_branch
          %273 = sbr.rel (%p271) target = $region24
        $region23: #{_forward.1} parent=11 // pred_region
          _
        $region24: #{_forward.1} parent=11 // pred_fallthru
          _
        // Predicated region
        $region25: #{_forward.1} parent=11 // pred_check
          %p274 = pneg %p130
        $region26: #{_forward.1} parent=11 // pred_check_branch
          %276 = sbr.rel (%p274) target = $region28
        $region27: #{_forward.1} parent=11 // pred_region
          %s278 = ssub.s32 256, 256
          %279 = vsyncadd [#allocation6], %s278
          %s280 = sshll.u32 [#allocation5], 4
          %s281 = int_to_ptr.vmem [resolvable:$true] %s280
          %286 = dma.hbm_to_vmem [thread:$0]  %s4, 256, %s281, [#allocation6], 64, 64, 4
        $region28: #{_forward.1} parent=11 // pred_fallthru
          _
        // Predicated region
        $region29: #{_forward.1} parent=11 // pred_check
          %p287 = pneg %p151
        $region30: #{_forward.1} parent=11 // pred_check_branch
          %289 = sbr.rel (%p287) target = $region32
        $region31: #{_forward.1} parent=11 // pred_region
          _
        $region32: #{_forward.1} parent=11 // pred_fallthru
          _
        // Predicated region
        $region33: #{_forward.1} parent=11 // pred_check
          %p290 = pneg %p172
        $region34: #{_forward.1} parent=11 // pred_check_branch
          %292 = sbr.rel (%p290) target = $region36
        $region35: #{_forward.1} parent=11 // pred_region
          _
        $region36: #{_forward.1} parent=11 // pred_fallthru
          _
        // Predicated region
        $region37: #{_forward.1} parent=11 // pred_check
          %p293 = pneg %p193
        $region38: #{_forward.1} parent=11 // pred_check_branch
          %295 = sbr.rel (%p293) target = $region40
        $region39: #{_forward.1} parent=11 // pred_region
          _
        $region40: #{_forward.1} parent=11 // pred_fallthru
          _
        // Predicated region
        $region41: #{_forward.1} parent=11 // pred_check
          %p296 = pneg %p214
        $region42: #{_forward.1} parent=11 // pred_check_branch
          %298 = sbr.rel (%p296) target = $region44
        $region43: #{_forward.1} parent=11 // pred_region
          _
        $region44: #{_forward.1} parent=11 // pred_fallthru
          _
      $region12: #{_forward.1} parent=5 // pred_fallthru
        _
      %p299 = scmp.lt.s32.totalorder %s20, 2
      // Predicated region
      $region45: #{_forward.1} parent=5 // pred_check
        %p300 = pneg %p299
      $region46: #{_forward.1} parent=5 // pred_check_branch
        %302 = sbr.rel (%p300) target = $region48
      $region47: #{_forward.1} parent=5 // pred_region
        // Predicated region
        $region49: #{_forward.1} parent=47 // pred_check
          %p303 = pneg %p40
        $region50: #{_forward.1} parent=47 // pred_check_branch
          %305 = sbr.rel (%p303) target = $region52
        $region51: #{_forward.1} parent=47 // pred_region
          %p306 = scmp.lt.s32.totalorder %s20, 1
          %s307 = scalar_select %p306, %s20, 1
          %s308 = smul.addr %s307, 4
          %s309 = scalar_lea.vmem %s0, %s308
        $region52: #{_forward.1} parent=47 // pred_fallthru
          _
      $region48: #{_forward.1} parent=5 // pred_fallthru
        _
      %p310 = scmp.le.s32.totalorder 1, %s20
      %p311 = scmp.lt.s32.totalorder %s20, 3
      %p312 = pnand %p310, %p311
      %p313 = pneg %p312
      // Predicated region
      $region53: #{_forward.1} parent=5 // pred_check
        _
      $region54: #{_forward.1} parent=5 // pred_check_branch
        %315 = sbr.rel (%p312) target = $region56
      $region55: #{_forward.1} parent=5 // pred_region
        %s316 = ssub.s32 %s20, 1
        // Predicated region
        $region57: #{_forward.1} parent=55 // pred_check
          %p317 = pneg %p88
        $region58: #{_forward.1} parent=55 // pred_check_branch
          %319 = sbr.rel (%p317) target = $region60
        $region59: #{_forward.1} parent=55 // pred_region
          %320 = dma.done [#allocation3], 256
        $region60: #{_forward.1} parent=55 // pred_fallthru
          _
        // Predicated region
        $region61: #{_forward.1} parent=55 // pred_check
          %p321 = pneg %p130
        $region62: #{_forward.1} parent=55 // pred_check_branch
          %323 = sbr.rel (%p321) target = $region64
        $region63: #{_forward.1} parent=55 // pred_region
          %324 = dma.done [#allocation6], 256
        $region64: #{_forward.1} parent=55 // pred_fallthru
          _
        %p325 = scmp.lt.s32.totalorder %s25, 1
        %s326 = scalar_select %p325, %s25, 1
        %s327 = smul.addr %s326, 4
        %s328 = scalar_lea.vmem %s0, %s327
        %p329 = pneg %p46
        %p330 = pneg %p43
        %p331 = pneg %p67
        %p332 = pneg %p64
        %p333 = pneg %p88
        %p334 = pneg %p85
        %p335 = pneg %p109
        %p336 = pneg %p106
        %p337 = pneg %p130
        %p338 = pneg %p127
        %p339 = pneg %p151
        %p340 = pneg %p148
        %p341 = pneg %p172
        %p342 = pneg %p169
        %p343 = pneg %p193
        %p344 = pneg %p190
        %p345 = pneg %p214
        %p346 = pneg %p211
        %p347 = pneg %p240
        %p348 = pneg %p237
        %s349 = sand.u32 %s227, 1
        %s350 = scalar_lea.sflag [#allocation4], %s349
        %s351 = sand.u32 %s227, 1
        %s352 = smul.addr %s351, 8
        %s353 = scalar_lea.vmem [#allocation7], %s352
        %p354 = scmp.lt.s32.totalorder %s25, 1
        %s355 = scalar_select %p354, %s25, 1
        %s356 = smul.addr %s355, 4
        %s357 = scalar_lea.vmem %s0, %s356
        %v359 = vld [vmem:[%s357] sm:$0xf]
        %v360 = vld [vmem:[%s1] sm:$0xf]
        %v361 = vld [vmem:[%s1 + $0x4] sm:$0xf]
        %v362 = vld [vmem:[%s1 + $0x8] sm:$0xf]
        %v363 = vld [vmem:[%s1 + $0xc] sm:$0xf]
        %v364 = vld [vmem:[%s5] sm:$0x1]
        %v366 = vlaneseq
        %v367 = vshrl.u32 %v366, 7
        %v368 = vsub.s32 0, %v367
        %v369 = vrot.slane %v364, %v368
        %v375 = vunpack.c.l.b16 %v360
        %v376 = vunpack.c.l.b16 %v361
        %v377 = vunpack.c.l.b16 %v362
        %v378 = vunpack.c.l.b16 %v363
        %v379 = vpack.c.b16 %v376, %v375
        %v380 = vpack.c.b16 %v378, %v377
        %vm383 = vcmask 261120
        %v385 = vsel %vm383, %v359, 0
        %387 = vmatprep.subr.bf16.mxu0 0
        %388 = vmatpush1.bf16.msra.mxu0 %v379
        %389 = vmatprep.subr.bf16.mxu0 0
        %390 = vmatpush1.bf16.msra.mxu0 %v380
        %391 = vmatprep.subr.bf16.mxu0 0
        %392 = vmatpush1.bf16.msra.mxu0 0
        %393 = vmatprep.subr.bf16.mxu0 0
        %394 = vmatpush1.bf16.msra.mxu0 0
        %395 = vmatprep.subr.bf16.mxu0 0
        %396 = vmatpush1.bf16.msra.mxu0 0
        %397 = vmatprep.subr.bf16.mxu0 0
        %398 = vmatpush1.bf16.msra.mxu0 0
        %399 = vmatprep.subr.bf16.mxu0 0
        %400 = vmatpush1.bf16.msra.mxu0 0
        %401 = vmatprep.subr.bf16.mxu0 0
        %402 = vmatpush1.bf16.msra.mxu0 0
        %403 = vmatprep.subr.bf16.mxu0 0
        %404 = vmatpush1.bf16.msra.mxu0 0
        %405 = vmatprep.subr.bf16.mxu0 0
        %406 = vmatpush1.bf16.msra.mxu0 0
        %407 = vmatprep.subr.bf16.mxu0 0
        %408 = vmatpush1.bf16.msra.mxu0 0
        %409 = vmatprep.subr.bf16.mxu0 0
        %410 = vmatpush1.bf16.msra.mxu0 0
        %411 = vmatprep.subr.bf16.mxu0 0
        %412 = vmatpush1.bf16.msra.mxu0 0
        %413 = vmatprep.subr.bf16.mxu0 0
        %414 = vmatpush1.bf16.msra.mxu0 0
        %415 = vmatprep.subr.bf16.mxu0 0
        %416 = vmatpush1.bf16.msra.mxu0 0
        %417 = vmatprep.subr.bf16.mxu0 0
        %418 = vmatpush1.bf16.msra.mxu0 0
        %419 = vmatprep.mubr.bf16.mxu0 0
        %420 = vmatmul.mubr.bf16.gmra.mrb[0].mxu0 %v385
        %v421 = vpop.f32.mrb[0].mxu0
        %v422 = vadd.f32 %v369, %v421
        %v423 = vpop.f32.mrb[0].mxu0
        %v424 = vpop.f32.mrb[0].mxu0
        %v425 = vpop.f32.mrb[0].mxu0
        %426 = vdwg.mxu0
        %v427 = vld [vmem:[#allocation2] sm:$0xf]
        %v428 = vld [vmem:[#allocation2 + $0x4] sm:$0xf]
        %v429 = vld [vmem:[#allocation2 + $0x8] sm:$0xf]
        %v430 = vld [vmem:[#allocation2 + $0xc] sm:$0xf]
        %v431 = vld [vmem:[%s6] sm:$0x1]
        %v433 = vlaneseq
        %v434 = vshrl.u32 %v433, 7
        %v435 = vsub.s32 0, %v434
        %v436 = vrot.slane %v431, %v435
        %v442 = vunpack.c.l.b16 %v427
        %v443 = vunpack.c.l.b16 %v428
        %v444 = vunpack.c.l.b16 %v429
        %v445 = vunpack.c.l.b16 %v430
        %v446 = vpack.c.b16 %v443, %v442
        %v447 = vpack.c.b16 %v445, %v444
        %450 = vmatprep.subr.bf16.mxu0 0
        %451 = vmatpush1.bf16.msra.mxu0 %v446
        %452 = vmatprep.subr.bf16.mxu0 0
        %453 = vmatpush1.bf16.msra.mxu0 %v447
        %454 = vmatprep.subr.bf16.mxu0 0
        %455 = vmatpush1.bf16.msra.mxu0 0
        %456 = vmatprep.subr.bf16.mxu0 0
        %457 = vmatpush1.bf16.msra.mxu0 0
        %458 = vmatprep.subr.bf16.mxu0 0
        %459 = vmatpush1.bf16.msra.mxu0 0
        %460 = vmatprep.subr.bf16.mxu0 0
        %461 = vmatpush1.bf16.msra.mxu0 0
        %462 = vmatprep.subr.bf16.mxu0 0
        %463 = vmatpush1.bf16.msra.mxu0 0
        %464 = vmatprep.subr.bf16.mxu0 0
        %465 = vmatpush1.bf16.msra.mxu0 0
        %466 = vmatprep.subr.bf16.mxu0 0
        %467 = vmatpush1.bf16.msra.mxu0 0
        %468 = vmatprep.subr.bf16.mxu0 0
        %469 = vmatpush1.bf16.msra.mxu0 0
        %470 = vmatprep.subr.bf16.mxu0 0
        %471 = vmatpush1.bf16.msra.mxu0 0
        %472 = vmatprep.subr.bf16.mxu0 0
        %473 = vmatpush1.bf16.msra.mxu0 0
        %474 = vmatprep.subr.bf16.mxu0 0
        %475 = vmatpush1.bf16.msra.mxu0 0
        %476 = vmatprep.subr.bf16.mxu0 0
        %477 = vmatpush1.bf16.msra.mxu0 0
        %478 = vmatprep.subr.bf16.mxu0 0
        %479 = vmatpush1.bf16.msra.mxu0 0
        %480 = vmatprep.subr.bf16.mxu0 0
        %481 = vmatpush1.bf16.msra.mxu0 0
        %482 = vmatprep.mubr.bf16.mxu0 0
        %483 = vmatmul.mubr.bf16.gmra.mrb[0].mxu0 %v385
        %v484 = vpop.f32.mrb[0].mxu0
        %v485 = vadd.f32 %v436, %v484
        %v486 = vpop.f32.mrb[0].mxu0
        %v487 = vpop.f32.mrb[0].mxu0
        %v488 = vpop.f32.mrb[0].mxu0
        %489 = vdwg.mxu0
        %v490 = vld [vmem:[%s3] sm:$0xf]
        %v491 = vld [vmem:[%s3 + $0x4] sm:$0xf]
        %v492 = vld [vmem:[%s3 + $0x8] sm:$0xf]
        %v493 = vld [vmem:[%s3 + $0xc] sm:$0xf]
        %v494 = vld [vmem:[%s7] sm:$0x1]
        %v496 = vlaneseq
        %v497 = vshrl.u32 %v496, 7
        %v498 = vsub.s32 0, %v497
        %v499 = vrot.slane %v494, %v498
        %v505 = vunpack.c.l.b16 %v490
        %v506 = vunpack.c.l.b16 %v491
        %v507 = vunpack.c.l.b16 %v492
        %v508 = vunpack.c.l.b16 %v493
        %v509 = vpack.c.b16 %v506, %v505
        %v510 = vpack.c.b16 %v508, %v507
        %513 = vmatprep.subr.bf16.mxu0 0
        %514 = vmatpush1.bf16.msra.mxu0 %v509
        %515 = vmatprep.subr.bf16.mxu0 0
        %516 = vmatpush1.bf16.msra.mxu0 %v510
        %517 = vmatprep.subr.bf16.mxu0 0
        %518 = vmatpush1.bf16.msra.mxu0 0
        %519 = vmatprep.subr.bf16.mxu0 0
        %520 = vmatpush1.bf16.msra.mxu0 0
        %521 = vmatprep.subr.bf16.mxu0 0
        %522 = vmatpush1.bf16.msra.mxu0 0
        %523 = vmatprep.subr.bf16.mxu0 0
        %524 = vmatpush1.bf16.msra.mxu0 0
        %525 = vmatprep.subr.bf16.mxu0 0
        %526 = vmatpush1.bf16.msra.mxu0 0
        %527 = vmatprep.subr.bf16.mxu0 0
        %528 = vmatpush1.bf16.msra.mxu0 0
        %529 = vmatprep.subr.bf16.mxu0 0
        %530 = vmatpush1.bf16.msra.mxu0 0
        %531 = vmatprep.subr.bf16.mxu0 0
        %532 = vmatpush1.bf16.msra.mxu0 0
        %533 = vmatprep.subr.bf16.mxu0 0
        %534 = vmatpush1.bf16.msra.mxu0 0
        %535 = vmatprep.subr.bf16.mxu0 0
        %536 = vmatpush1.bf16.msra.mxu0 0
        %537 = vmatprep.subr.bf16.mxu0 0
        %538 = vmatpush1.bf16.msra.mxu0 0
        %539 = vmatprep.subr.bf16.mxu0 0
        %540 = vmatpush1.bf16.msra.mxu0 0
        %541 = vmatprep.subr.bf16.mxu0 0
        %542 = vmatpush1.bf16.msra.mxu0 0
        %543 = vmatprep.subr.bf16.mxu0 0
        %544 = vmatpush1.bf16.msra.mxu0 0
        %545 = vmatprep.mubr.bf16.mxu0 0
        %546 = vmatmul.mubr.bf16.gmra.mrb[0].mxu0 %v385
        %v547 = vpop.f32.mrb[0].mxu0
        %v548 = vadd.f32 %v499, %v547
        %v549 = vpop.f32.mrb[0].mxu0
        %v550 = vpop.f32.mrb[0].mxu0
        %v551 = vpop.f32.mrb[0].mxu0
        %552 = vdwg.mxu0
        %v553 = vpack.c.bf16 %v422, %v422
        %555 = vrot.lane.b32.xlu0 %v553, 120
        %v556 = vpop.permute.xlu0 %555
        %557 = vrot.lane.b32.xlu0 %v553, 112
        %v558 = vpop.permute.xlu0 %557
        %559 = vrot.lane.b32.xlu0 %v553, 104
        %v560 = vpop.permute.xlu0 %559
        %v562 = vunpack.c.l.s4 1983009808
        %v563 = vunpack.c.0.s8 %v562
        %v564 = vlaneseq
        %v565 = vshrl.u32 %v564, 7
        %v566 = vsub.s32 %v563, %v565
        %v567 = vrot.slane %v553, %v566
        %v570 = vunpack.c.l.s4 1983009808
        %v571 = vunpack.c.0.s8 %v570
        %v572 = vlaneseq
        %v573 = vshrl.u32 %v572, 7
        %v574 = vsub.s32 %v571, %v573
        %v575 = vrot.slane %v558, %v574
        %v576 = vcombine.low %v567, %v575
        %v577 = vcombine.high %v567, %v575
        %v579 = vunpack.c.l.s4 1934713408
        %v580 = vunpack.c.0.s8 %v579
        %v581 = vlaneseq
        %v582 = vshrl.u32 %v581, 7
        %v583 = vsub.s32 %v580, %v582
        %v584 = vrot.slane %v576, %v583
        %v586 = vunpack.c.l.s4 1934713408
        %v587 = vunpack.c.0.s8 %v586
        %v588 = vlaneseq
        %v589 = vshrl.u32 %v588, 7
        %v590 = vsub.s32 %v587, %v589
        %v591 = vrot.slane %v577, %v590
        %v592 = vcombine.high %v584, 0
        %v593 = vcombine.high %v591, 0
        %v596 = vunpack.c.l.s4 1983009808
        %v597 = vunpack.c.0.s8 %v596
        %v598 = vlaneseq
        %v599 = vshrl.u32 %v598, 7
        %v600 = vsub.s32 %v597, %v599
        %v601 = vrot.slane %v556, %v600
        %v604 = vunpack.c.l.s4 1983009808
        %v605 = vunpack.c.0.s8 %v604
        %v606 = vlaneseq
        %v607 = vshrl.u32 %v606, 7
        %v608 = vsub.s32 %v605, %v607
        %v609 = vrot.slane %v560, %v608
        %v610 = vcombine.low %v601, %v609
        %v611 = vcombine.high %v601, %v609
        %v613 = vunpack.c.l.s4 1934713408
        %v614 = vunpack.c.0.s8 %v613
        %v615 = vlaneseq
        %v616 = vshrl.u32 %v615, 7
        %v617 = vsub.s32 %v614, %v616
        %v618 = vrot.slane %v610, %v617
        %v620 = vunpack.c.l.s4 1934713408
        %v621 = vunpack.c.0.s8 %v620
        %v622 = vlaneseq
        %v623 = vshrl.u32 %v622, 7
        %v624 = vsub.s32 %v621, %v623
        %v625 = vrot.slane %v611, %v624
        %v626 = vcombine.high %v618, 0
        %v627 = vcombine.high %v625, 0
        %v630 = vpack.i.b16 %v618, %v584
        %v632 = vshrl.u32 %v584, 16
        %v633 = vshrl.u32 %v618, 16
        %v634 = vpack.i.b16 %v633, %v632
        %v638 = vpack.i.b16 %v626, %v592
        %v640 = vshrl.u32 %v592, 16
        %v641 = vshrl.u32 %v626, 16
        %v642 = vpack.i.b16 %v641, %v640
        %v646 = vpack.i.b16 %v625, %v591
        %v648 = vshrl.u32 %v591, 16
        %v649 = vshrl.u32 %v625, 16
        %v650 = vpack.i.b16 %v649, %v648
        %v654 = vpack.i.b16 %v627, %v593
        %v656 = vshrl.u32 %v593, 16
        %v657 = vshrl.u32 %v627, 16
        %v658 = vpack.i.b16 %v657, %v656
        %v660 = vcombine.low %v630, %v646
        %v662 = vunpack.c.l.s4 1983009808
        %v663 = vunpack.c.0.s8 %v662
        %v664 = vlaneseq
        %v665 = vshrl.u32 %v664, 7
        %v666 = vsub.s32 %v663, %v665
        %v667 = vrot.slane %v660, %v666
        %v668 = vcombine.low %v638, %v654
        %v670 = vunpack.c.l.s4 1983009808
        %v671 = vunpack.c.0.s8 %v670
        %v672 = vlaneseq
        %v673 = vshrl.u32 %v672, 7
        %v674 = vsub.s32 %v671, %v673
        %v675 = vrot.slane %v668, %v674
        %v676 = vcombine.low %v667, %v675
        %v678 = vunpack.c.l.s4 1934713408
        %v679 = vunpack.c.0.s8 %v678
        %v680 = vlaneseq
        %v681 = vshrl.u32 %v680, 7
        %v682 = vsub.s32 %v679, %v681
        %v683 = vrot.slane %v676, %v682
        %v684 = vcombine.high %v683, 0
        %v685 = vcombine.low %v634, %v650
        %v687 = vunpack.c.l.s4 1983009808
        %v688 = vunpack.c.0.s8 %v687
        %v689 = vlaneseq
        %v690 = vshrl.u32 %v689, 7
        %v691 = vsub.s32 %v688, %v690
        %v692 = vrot.slane %v685, %v691
        %v693 = vcombine.low %v642, %v658
        %v695 = vunpack.c.l.s4 1983009808
        %v696 = vunpack.c.0.s8 %v695
        %v697 = vlaneseq
        %v698 = vshrl.u32 %v697, 7
        %v699 = vsub.s32 %v696, %v698
        %v700 = vrot.slane %v693, %v699
        %v701 = vcombine.low %v692, %v700
        %v703 = vunpack.c.l.s4 1934713408
        %v704 = vunpack.c.0.s8 %v703
        %v705 = vlaneseq
        %v706 = vshrl.u32 %v705, 7
        %v707 = vsub.s32 %v704, %v706
        %v708 = vrot.slane %v701, %v707
        %v709 = vcombine.high %v708, 0
        %v712 = vpack.i.b16 %v708, %v683
        %v713 = vshrl.u32 %v683, 16
        %v714 = vshrl.u32 %v708, 16
        %v715 = vpack.i.b16 %v714, %v713
        %v718 = vpack.i.b16 %v709, %v684
        %v719 = vshrl.u32 %v684, 16
        %v720 = vshrl.u32 %v709, 16
        %v721 = vpack.i.b16 %v720, %v719
        %v722 = vpack.c.bf16 %v485, %v485
        %724 = vrot.lane.b32.xlu0 %v722, 120
        %v725 = vpop.permute.xlu0 %724
        %726 = vrot.lane.b32.xlu0 %v722, 112
        %v727 = vpop.permute.xlu0 %726
        %728 = vrot.lane.b32.xlu0 %v722, 104
        %v729 = vpop.permute.xlu0 %728
        %v731 = vunpack.c.l.s4 1983009808
        %v732 = vunpack.c.0.s8 %v731
        %v733 = vlaneseq
        %v734 = vshrl.u32 %v733, 7
        %v735 = vsub.s32 %v732, %v734
        %v736 = vrot.slane %v722, %v735
        %v739 = vunpack.c.l.s4 1983009808
        %v740 = vunpack.c.0.s8 %v739
        %v741 = vlaneseq
        %v742 = vshrl.u32 %v741, 7
        %v743 = vsub.s32 %v740, %v742
        %v744 = vrot.slane %v727, %v743
        %v745 = vcombine.low %v736, %v744
        %v746 = vcombine.high %v736, %v744
        %v748 = vunpack.c.l.s4 1934713408
        %v749 = vunpack.c.0.s8 %v748
        %v750 = vlaneseq
        %v751 = vshrl.u32 %v750, 7
        %v752 = vsub.s32 %v749, %v751
        %v753 = vrot.slane %v745, %v752
        %v755 = vunpack.c.l.s4 1934713408
        %v756 = vunpack.c.0.s8 %v755
        %v757 = vlaneseq
        %v758 = vshrl.u32 %v757, 7
        %v759 = vsub.s32 %v756, %v758
        %v760 = vrot.slane %v746, %v759
        %v761 = vcombine.high %v753, 0
        %v762 = vcombine.high %v760, 0
        %v765 = vunpack.c.l.s4 1983009808
        %v766 = vunpack.c.0.s8 %v765
        %v767 = vlaneseq
        %v768 = vshrl.u32 %v767, 7
        %v769 = vsub.s32 %v766, %v768
        %v770 = vrot.slane %v725, %v769
        %v773 = vunpack.c.l.s4 1983009808
        %v774 = vunpack.c.0.s8 %v773
        %v775 = vlaneseq
        %v776 = vshrl.u32 %v775, 7
        %v777 = vsub.s32 %v774, %v776
        %v778 = vrot.slane %v729, %v777
        %v779 = vcombine.low %v770, %v778
        %v780 = vcombine.high %v770, %v778
        %v782 = vunpack.c.l.s4 1934713408
        %v783 = vunpack.c.0.s8 %v782
        %v784 = vlaneseq
        %v785 = vshrl.u32 %v784, 7
        %v786 = vsub.s32 %v783, %v785
        %v787 = vrot.slane %v779, %v786
        %v789 = vunpack.c.l.s4 1934713408
        %v790 = vunpack.c.0.s8 %v789
        %v791 = vlaneseq
        %v792 = vshrl.u32 %v791, 7
        %v793 = vsub.s32 %v790, %v792
        %v794 = vrot.slane %v780, %v793
        %v795 = vcombine.high %v787, 0
        %v796 = vcombine.high %v794, 0
        %v799 = vpack.i.b16 %v787, %v753
        %v801 = vshrl.u32 %v753, 16
        %v802 = vshrl.u32 %v787, 16
        %v803 = vpack.i.b16 %v802, %v801
        %v807 = vpack.i.b16 %v795, %v761
        %v809 = vshrl.u32 %v761, 16
        %v810 = vshrl.u32 %v795, 16
        %v811 = vpack.i.b16 %v810, %v809
        %v815 = vpack.i.b16 %v794, %v760
        %v817 = vshrl.u32 %v760, 16
        %v818 = vshrl.u32 %v794, 16
        %v819 = vpack.i.b16 %v818, %v817
        %v823 = vpack.i.b16 %v796, %v762
        %v825 = vshrl.u32 %v762, 16
        %v826 = vshrl.u32 %v796, 16
        %v827 = vpack.i.b16 %v826, %v825
        %v829 = vcombine.low %v799, %v815
        %v831 = vunpack.c.l.s4 1983009808
        %v832 = vunpack.c.0.s8 %v831
        %v833 = vlaneseq
        %v834 = vshrl.u32 %v833, 7
        %v835 = vsub.s32 %v832, %v834
        %v836 = vrot.slane %v829, %v835
        %v837 = vcombine.low %v807, %v823
        %v839 = vunpack.c.l.s4 1983009808
        %v840 = vunpack.c.0.s8 %v839
        %v841 = vlaneseq
        %v842 = vshrl.u32 %v841, 7
        %v843 = vsub.s32 %v840, %v842
        %v844 = vrot.slane %v837, %v843
        %v845 = vcombine.low %v836, %v844
        %v847 = vunpack.c.l.s4 1934713408
        %v848 = vunpack.c.0.s8 %v847
        %v849 = vlaneseq
        %v850 = vshrl.u32 %v849, 7
        %v851 = vsub.s32 %v848, %v850
        %v852 = vrot.slane %v845, %v851
        %v853 = vcombine.high %v852, 0
        %v854 = vcombine.low %v803, %v819
        %v856 = vunpack.c.l.s4 1983009808
        %v857 = vunpack.c.0.s8 %v856
        %v858 = vlaneseq
        %v859 = vshrl.u32 %v858, 7
        %v860 = vsub.s32 %v857, %v859
        %v861 = vrot.slane %v854, %v860
        %v862 = vcombine.low %v811, %v827
        %v864 = vunpack.c.l.s4 1983009808
        %v865 = vunpack.c.0.s8 %v864
        %v866 = vlaneseq
        %v867 = vshrl.u32 %v866, 7
        %v868 = vsub.s32 %v865, %v867
        %v869 = vrot.slane %v862, %v868
        %v870 = vcombine.low %v861, %v869
        %v872 = vunpack.c.l.s4 1934713408
        %v873 = vunpack.c.0.s8 %v872
        %v874 = vlaneseq
        %v875 = vshrl.u32 %v874, 7
        %v876 = vsub.s32 %v873, %v875
        %v877 = vrot.slane %v870, %v876
        %v878 = vcombine.high %v877, 0
        %v881 = vpack.i.b16 %v877, %v852
        %v882 = vshrl.u32 %v852, 16
        %v883 = vshrl.u32 %v877, 16
        %v884 = vpack.i.b16 %v883, %v882
        %v887 = vpack.i.b16 %v878, %v853
        %v888 = vshrl.u32 %v853, 16
        %v889 = vshrl.u32 %v878, 16
        %v890 = vpack.i.b16 %v889, %v888
        %v891 = vpack.c.bf16 %v548, %v548
        %893 = vrot.lane.b32.xlu0 %v891, 120
        %v894 = vpop.permute.xlu0 %893
        %895 = vrot.lane.b32.xlu0 %v891, 112
        %v896 = vpop.permute.xlu0 %895
        %897 = vrot.lane.b32.xlu0 %v891, 104
        %v898 = vpop.permute.xlu0 %897
        %v900 = vunpack.c.l.s4 1983009808
        %v901 = vunpack.c.0.s8 %v900
        %v902 = vlaneseq
        %v903 = vshrl.u32 %v902, 7
        %v904 = vsub.s32 %v901, %v903
        %v905 = vrot.slane %v891, %v904
        %v908 = vunpack.c.l.s4 1983009808
        %v909 = vunpack.c.0.s8 %v908
        %v910 = vlaneseq
        %v911 = vshrl.u32 %v910, 7
        %v912 = vsub.s32 %v909, %v911
        %v913 = vrot.slane %v896, %v912
        %v914 = vcombine.low %v905, %v913
        %v915 = vcombine.high %v905, %v913
        %v917 = vunpack.c.l.s4 1934713408
        %v918 = vunpack.c.0.s8 %v917
        %v919 = vlaneseq
        %v920 = vshrl.u32 %v919, 7
        %v921 = vsub.s32 %v918, %v920
        %v922 = vrot.slane %v914, %v921
        %v924 = vunpack.c.l.s4 1934713408
        %v925 = vunpack.c.0.s8 %v924
        %v926 = vlaneseq
        %v927 = vshrl.u32 %v926, 7
        %v928 = vsub.s32 %v925, %v927
        %v929 = vrot.slane %v915, %v928
        %v930 = vcombine.high %v922, 0
        %v931 = vcombine.high %v929, 0
        %v934 = vunpack.c.l.s4 1983009808
        %v935 = vunpack.c.0.s8 %v934
        %v936 = vlaneseq
        %v937 = vshrl.u32 %v936, 7
        %v938 = vsub.s32 %v935, %v937
        %v939 = vrot.slane %v894, %v938
        %v942 = vunpack.c.l.s4 1983009808
        %v943 = vunpack.c.0.s8 %v942
        %v944 = vlaneseq
        %v945 = vshrl.u32 %v944, 7
        %v946 = vsub.s32 %v943, %v945
        %v947 = vrot.slane %v898, %v946
        %v948 = vcombine.low %v939, %v947
        %v949 = vcombine.high %v939, %v947
        %v951 = vunpack.c.l.s4 1934713408
        %v952 = vunpack.c.0.s8 %v951
        %v953 = vlaneseq
        %v954 = vshrl.u32 %v953, 7
        %v955 = vsub.s32 %v952, %v954
        %v956 = vrot.slane %v948, %v955
        %v958 = vunpack.c.l.s4 1934713408
        %v959 = vunpack.c.0.s8 %v958
        %v960 = vlaneseq
        %v961 = vshrl.u32 %v960, 7
        %v962 = vsub.s32 %v959, %v961
        %v963 = vrot.slane %v949, %v962
        %v964 = vcombine.high %v956, 0
        %v965 = vcombine.high %v963, 0
        %v968 = vpack.i.b16 %v956, %v922
        %v970 = vshrl.u32 %v922, 16
        %v971 = vshrl.u32 %v956, 16
        %v972 = vpack.i.b16 %v971, %v970
        %v976 = vpack.i.b16 %v964, %v930
        %v978 = vshrl.u32 %v930, 16
        %v979 = vshrl.u32 %v964, 16
        %v980 = vpack.i.b16 %v979, %v978
        %v984 = vpack.i.b16 %v963, %v929
        %v986 = vshrl.u32 %v929, 16
        %v987 = vshrl.u32 %v963, 16
        %v988 = vpack.i.b16 %v987, %v986
        %v992 = vpack.i.b16 %v965, %v931
        %v994 = vshrl.u32 %v931, 16
        %v995 = vshrl.u32 %v965, 16
        %v996 = vpack.i.b16 %v995, %v994
        %v998 = vcombine.low %v968, %v984
        %v1000 = vunpack.c.l.s4 1983009808
        %v1001 = vunpack.c.0.s8 %v1000
        %v1002 = vlaneseq
        %v1003 = vshrl.u32 %v1002, 7
        %v1004 = vsub.s32 %v1001, %v1003
        %v1005 = vrot.slane %v998, %v1004
        %v1006 = vcombine.low %v976, %v992
        %v1008 = vunpack.c.l.s4 1983009808
        %v1009 = vunpack.c.0.s8 %v1008
        %v1010 = vlaneseq
        %v1011 = vshrl.u32 %v1010, 7
        %v1012 = vsub.s32 %v1009, %v1011
        %v1013 = vrot.slane %v1006, %v1012
        %v1014 = vcombine.low %v1005, %v1013
        %v1016 = vunpack.c.l.s4 1934713408
        %v1017 = vunpack.c.0.s8 %v1016
        %v1018 = vlaneseq
        %v1019 = vshrl.u32 %v1018, 7
        %v1020 = vsub.s32 %v1017, %v1019
        %v1021 = vrot.slane %v1014, %v1020
        %v1022 = vcombine.high %v1021, 0
        %v1023 = vcombine.low %v972, %v988
        %v1025 = vunpack.c.l.s4 1983009808
        %v1026 = vunpack.c.0.s8 %v1025
        %v1027 = vlaneseq
        %v1028 = vshrl.u32 %v1027, 7
        %v1029 = vsub.s32 %v1026, %v1028
        %v1030 = vrot.slane %v1023, %v1029
        %v1031 = vcombine.low %v980, %v996
        %v1033 = vunpack.c.l.s4 1983009808
        %v1034 = vunpack.c.0.s8 %v1033
        %v1035 = vlaneseq
        %v1036 = vshrl.u32 %v1035, 7
        %v1037 = vsub.s32 %v1034, %v1036
        %v1038 = vrot.slane %v1031, %v1037
        %v1039 = vcombine.low %v1030, %v1038
        %v1041 = vunpack.c.l.s4 1934713408
        %v1042 = vunpack.c.0.s8 %v1041
        %v1043 = vlaneseq
        %v1044 = vshrl.u32 %v1043, 7
        %v1045 = vsub.s32 %v1042, %v1044
        %v1046 = vrot.slane %v1039, %v1045
        %v1047 = vcombine.high %v1046, 0
        %v1050 = vpack.i.b16 %v1046, %v1021
        %v1051 = vshrl.u32 %v1021, 16
        %v1052 = vshrl.u32 %v1046, 16
        %v1053 = vpack.i.b16 %v1052, %v1051
        %v1056 = vpack.i.b16 %v1047, %v1022
        %v1057 = vshrl.u32 %v1022, 16
        %v1058 = vshrl.u32 %v1047, 16
        %v1059 = vpack.i.b16 %v1058, %v1057
        %vm1060 = vcmask 64512
        %v1062 = vsel %vm1060, %v712, 0
        %v1065 = vsel %vm1060, %v881, 0
        %1067 = vmatprep.subr.bf16.mxu0 0
        %1068 = vmatpush1.bf16.xpose.msra.mxu0 %v1065
        %1069 = vmatprep.subr.bf16.mxu0 0
        %1070 = vmatpush1.bf16.xpose.msra.mxu0 0
        %1071 = vmatprep.subr.bf16.mxu0 0
        %1072 = vmatpush1.bf16.xpose.msra.mxu0 0
        %1073 = vmatprep.subr.bf16.mxu0 0
        %1074 = vmatpush1.bf16.xpose.msra.mxu0 0
        %1075 = vmatprep.subr.bf16.mxu0 0
        %1076 = vmatpush1.bf16.xpose.msra.mxu0 0
        %1077 = vmatprep.subr.bf16.mxu0 0
        %1078 = vmatpush1.bf16.xpose.msra.mxu0 0
        %1079 = vmatprep.subr.bf16.mxu0 0
        %1080 = vmatpush1.bf16.xpose.msra.mxu0 0
        %1081 = vmatprep.subr.bf16.mxu0 0
        %1082 = vmatpush1.bf16.xpose.msra.mxu0 0
        %1083 = vmatprep.subr.bf16.mxu0 0
        %1084 = vmatpush1.bf16.xpose.msra.mxu0 0
        %1085 = vmatprep.subr.bf16.mxu0 0
        %1086 = vmatpush1.bf16.xpose.msra.mxu0 0
        %1087 = vmatprep.subr.bf16.mxu0 0
        %1088 = vmatpush1.bf16.xpose.msra.mxu0 0
        %1089 = vmatprep.subr.bf16.mxu0 0
        %1090 = vmatpush1.bf16.xpose.msra.mxu0 0
        %1091 = vmatprep.subr.bf16.mxu0 0
        %1092 = vmatpush1.bf16.xpose.msra.mxu0 0
        %1093 = vmatprep.subr.bf16.mxu0 0
        %1094 = vmatpush1.bf16.xpose.msra.mxu0 0
        %1095 = vmatprep.subr.bf16.mxu0 0
        %1096 = vmatpush1.bf16.xpose.msra.mxu0 0
        %1097 = vmatprep.subr.bf16.mxu0 0
        %1098 = vmatpush1.bf16.xpose.msra.mxu0 0
        %1099 = vmatprep.mubr.bf16.mxu0 0
        %1100 = vmatmul.mubr.bf16.gmra.mrb[0].mxu0 %v1062
        %v1101 = vpop.f32.mrb[0].mxu0
        %v1102 = vadd.f32 0.0, %v1101
        %v1103 = vpop.f32.mrb[0].mxu0
        %v1104 = vpop.f32.mrb[0].mxu0
        %v1105 = vpop.f32.mrb[0].mxu0
        %1106 = vdwg.mxu0
        %v1108 = vsel %vm1060, %v715, 0
        %v1111 = vsel %vm1060, %v884, 0
        %1113 = vmatprep.subr.bf16.mxu0 0
        %1114 = vmatpush1.bf16.xpose.msra.mxu0 %v1111
        %1115 = vmatprep.subr.bf16.mxu0 0
        %1116 = vmatpush1.bf16.xpose.msra.mxu0 0
        %1117 = vmatprep.subr.bf16.mxu0 0
        %1118 = vmatpush1.bf16.xpose.msra.mxu0 0
        %1119 = vmatprep.subr.bf16.mxu0 0
        %1120 = vmatpush1.bf16.xpose.msra.mxu0 0
        %1121 = vmatprep.subr.bf16.mxu0 0
        %1122 = vmatpush1.bf16.xpose.msra.mxu0 0
        %1123 = vmatprep.subr.bf16.mxu0 0
        %1124 = vmatpush1.bf16.xpose.msra.mxu0 0
        %1125 = vmatprep.subr.bf16.mxu0 0
        %1126 = vmatpush1.bf16.xpose.msra.mxu0 0
        %1127 = vmatprep.subr.bf16.mxu0 0
        %1128 = vmatpush1.bf16.xpose.msra.mxu0 0
        %1129 = vmatprep.subr.bf16.mxu0 0
        %1130 = vmatpush1.bf16.xpose.msra.mxu0 0
        %1131 = vmatprep.subr.bf16.mxu0 0
        %1132 = vmatpush1.bf16.xpose.msra.mxu0 0
        %1133 = vmatprep.subr.bf16.mxu0 0
        %1134 = vmatpush1.bf16.xpose.msra.mxu0 0
        %1135 = vmatprep.subr.bf16.mxu0 0
        %1136 = vmatpush1.bf16.xpose.msra.mxu0 0
        %1137 = vmatprep.subr.bf16.mxu0 0
        %1138 = vmatpush1.bf16.xpose.msra.mxu0 0
        %1139 = vmatprep.subr.bf16.mxu0 0
        %1140 = vmatpush1.bf16.xpose.msra.mxu0 0
        %1141 = vmatprep.subr.bf16.mxu0 0
        %1142 = vmatpush1.bf16.xpose.msra.mxu0 0
        %1143 = vmatprep.subr.bf16.mxu0 0
        %1144 = vmatpush1.bf16.xpose.msra.mxu0 0
        %1145 = vmatprep.mubr.bf16.mxu0 0
        %1146 = vmatmul.mubr.bf16.gmra.mrb[0].mxu0 %v1108
        %v1147 = vpop.f32.mrb[0].mxu0
        %v1148 = vadd.f32 0.0, %v1147
        %v1149 = vpop.f32.mrb[0].mxu0
        %v1150 = vpop.f32.mrb[0].mxu0
        %v1151 = vpop.f32.mrb[0].mxu0
        %1152 = vdwg.mxu0
        %v1154 = vsel %vm1060, %v718, 0
        %v1157 = vsel %vm1060, %v887, 0
        %1159 = vmatprep.subr.bf16.mxu0 0
        %1160 = vmatpush1.bf16.xpose.msra.mxu0 %v1157
        %1161 = vmatprep.subr.bf16.mxu0 0
        %1162 = vmatpush1.bf16.xpose.msra.mxu0 0
        %1163 = vmatprep.subr.bf16.mxu0 0
        %1164 = vmatpush1.bf16.xpose.msra.mxu0 0
        %1165 = vmatprep.subr.bf16.mxu0 0
        %1166 = vmatpush1.bf16.xpose.msra.mxu0 0
        %1167 = vmatprep.subr.bf16.mxu0 0
        %1168 = vmatpush1.bf16.xpose.msra.mxu0 0
        %1169 = vmatprep.subr.bf16.mxu0 0
        %1170 = vmatpush1.bf16.xpose.msra.mxu0 0
        %1171 = vmatprep.subr.bf16.mxu0 0
        %1172 = vmatpush1.bf16.xpose.msra.mxu0 0
        %1173 = vmatprep.subr.bf16.mxu0 0
        %1174 = vmatpush1.bf16.xpose.msra.mxu0 0
        %1175 = vmatprep.subr.bf16.mxu0 0
        %1176 = vmatpush1.bf16.xpose.msra.mxu0 0
        %1177 = vmatprep.subr.bf16.mxu0 0
        %1178 = vmatpush1.bf16.xpose.msra.mxu0 0
        %1179 = vmatprep.subr.bf16.mxu0 0
        %1180 = vmatpush1.bf16.xpose.msra.mxu0 0
        %1181 = vmatprep.subr.bf16.mxu0 0
        %1182 = vmatpush1.bf16.xpose.msra.mxu0 0
        %1183 = vmatprep.subr.bf16.mxu0 0
        %1184 = vmatpush1.bf16.xpose.msra.mxu0 0
        %1185 = vmatprep.subr.bf16.mxu0 0
        %1186 = vmatpush1.bf16.xpose.msra.mxu0 0
        %1187 = vmatprep.subr.bf16.mxu0 0
        %1188 = vmatpush1.bf16.xpose.msra.mxu0 0
        %1189 = vmatprep.subr.bf16.mxu0 0
        %1190 = vmatpush1.bf16.xpose.msra.mxu0 0
        %1191 = vmatprep.mubr.bf16.mxu0 0
        %1192 = vmatmul.mubr.bf16.gmra.mrb[0].mxu0 %v1154
        %v1193 = vpop.f32.mrb[0].mxu0
        %v1194 = vadd.f32 0.0, %v1193
        %v1195 = vpop.f32.mrb[0].mxu0
        %v1196 = vpop.f32.mrb[0].mxu0
        %v1197 = vpop.f32.mrb[0].mxu0
        %1198 = vdwg.mxu0
        %v1200 = vsel %vm1060, %v721, 0
        %v1203 = vsel %vm1060, %v890, 0
        %1205 = vmatprep.subr.bf16.mxu0 0
        %1206 = vmatpush1.bf16.xpose.msra.mxu0 %v1203
        %1207 = vmatprep.subr.bf16.mxu0 0
        %1208 = vmatpush1.bf16.xpose.msra.mxu0 0
        %1209 = vmatprep.subr.bf16.mxu0 0
        %1210 = vmatpush1.bf16.xpose.msra.mxu0 0
        %1211 = vmatprep.subr.bf16.mxu0 0
        %1212 = vmatpush1.bf16.xpose.msra.mxu0 0
        %1213 = vmatprep.subr.bf16.mxu0 0
        %1214 = vmatpush1.bf16.xpose.msra.mxu0 0
        %1215 = vmatprep.subr.bf16.mxu0 0
        %1216 = vmatpush1.bf16.xpose.msra.mxu0 0
        %1217 = vmatprep.subr.bf16.mxu0 0
        %1218 = vmatpush1.bf16.xpose.msra.mxu0 0
        %1219 = vmatprep.subr.bf16.mxu0 0
        %1220 = vmatpush1.bf16.xpose.msra.mxu0 0
        %1221 = vmatprep.subr.bf16.mxu0 0
        %1222 = vmatpush1.bf16.xpose.msra.mxu0 0
        %1223 = vmatprep.subr.bf16.mxu0 0
        %1224 = vmatpush1.bf16.xpose.msra.mxu0 0
        %1225 = vmatprep.subr.bf16.mxu0 0
        %1226 = vmatpush1.bf16.xpose.msra.mxu0 0
        %1227 = vmatprep.subr.bf16.mxu0 0
        %1228 = vmatpush1.bf16.xpose.msra.mxu0 0
        %1229 = vmatprep.subr.bf16.mxu0 0
        %1230 = vmatpush1.bf16.xpose.msra.mxu0 0
        %1231 = vmatprep.subr.bf16.mxu0 0
        %1232 = vmatpush1.bf16.xpose.msra.mxu0 0
        %1233 = vmatprep.subr.bf16.mxu0 0
        %1234 = vmatpush1.bf16.xpose.msra.mxu0 0
        %1235 = vmatprep.subr.bf16.mxu0 0
        %1236 = vmatpush1.bf16.xpose.msra.mxu0 0
        %1237 = vmatprep.mubr.bf16.mxu0 0
        %1238 = vmatmul.mubr.bf16.gmra.mrb[0].mxu0 %v1200
        %v1239 = vpop.f32.mrb[0].mxu0
        %v1240 = vadd.f32 0.0, %v1239
        %v1241 = vpop.f32.mrb[0].mxu0
        %v1242 = vpop.f32.mrb[0].mxu0
        %v1243 = vpop.f32.mrb[0].mxu0
        %1244 = vdwg.mxu0
        %v1245 = vlaneseq
        %v1246 = vshrl.u32 %v1245, 7
        %v1247 = vlaneseq
        %v1248 = vand.u32 %v1247, 127
        %vm1249 = vcmp.ge.s32.totalorder %v1246, %v1248
        %v1250 = vsel %vm1249, 1, 0
        %vm1251 = vcmp.eq.s32.totalorder %v1250, 1
        %v1252 = vsel %vm1251, %v1102, -inf
        %v1253 = vsel %vm1251, %v1148, -inf
        %v1254 = vsel %vm1251, %v1194, -inf
        %v1255 = vsel %vm1251, %v1240, -inf
        %v1256 = vsel %vm1060, %v1252, -inf
        %1257 = vmax.xlane.f32.xlu0 %v1256
        %v1258 = vpop.xlane.xlu0 %1257
        %v1259 = vsel %vm1060, %v1253, -inf
        %1260 = vmax.xlane.f32.xlu0 %v1259
        %v1261 = vpop.xlane.xlu0 %1260
        %v1262 = vsel %vm1060, %v1254, -inf
        %1263 = vmax.xlane.f32.xlu0 %v1262
        %v1264 = vpop.xlane.xlu0 %1263
        %v1265 = vsel %vm1060, %v1255, -inf
        %1266 = vmax.xlane.f32.xlu0 %v1265
        %v1267 = vpop.xlane.xlu0 %1266
        %v1268 = vsub.f32 %v1252, %v1258
        %v1269 = vsub.f32 %v1253, %v1261
        %v1270 = vsub.f32 %v1254, %v1264
        %v1271 = vsub.f32 %v1255, %v1267
        %v1272 = vmul.f32 %v1268, 1.442695
        %v1273 = vpow.pop %v1272
        %v1274 = vmul.f32 %v1269, 1.442695
        %v1275 = vpow.pop %v1274
        %v1276 = vmul.f32 %v1270, 1.442695
        %v1277 = vpow.pop %v1276
        %v1278 = vmul.f32 %v1271, 1.442695
        %v1279 = vpow.pop %v1278
        %v1280 = vsel %vm1060, %v1273, 0.0
        %1281 = vadd.xlane.f32.xlu0 %v1280
        %v1282 = vpop.xlane.xlu0 %1281
        %v1283 = vsel %vm1060, %v1275, 0.0
        %1284 = vadd.xlane.f32.xlu0 %v1283
        %v1285 = vpop.xlane.xlu0 %1284
        %v1286 = vsel %vm1060, %v1277, 0.0
        %1287 = vadd.xlane.f32.xlu0 %v1286
        %v1288 = vpop.xlane.xlu0 %1287
        %v1289 = vsel %vm1060, %v1279, 0.0
        %1290 = vadd.xlane.f32.xlu0 %v1289
        %v1291 = vpop.xlane.xlu0 %1290
        %v1292 = vpack.c.bf16 %v1273, %v1273
        %v1293 = vpack.c.bf16 %v1275, %v1275
        %v1294 = vpack.c.bf16 %v1277, %v1277
        %v1295 = vpack.c.bf16 %v1279, %v1279
        %v1297 = vsel %vm1060, %v1292, 0
        %vm1299 = vcmask 1043456
        %v1301 = vsel %vm1299, %v1050, 0
        %1303 = vmatprep.subr.bf16.mxu0 0
        %1304 = vmatpush1.bf16.msra.mxu0 %v1301
        %1305 = vmatprep.subr.bf16.mxu0 0
        %1306 = vmatpush1.bf16.msra.mxu0 0
        %1307 = vmatprep.subr.bf16.mxu0 0
        %1308 = vmatpush1.bf16.msra.mxu0 0
        %1309 = vmatprep.subr.bf16.mxu0 0
        %1310 = vmatpush1.bf16.msra.mxu0 0
        %1311 = vmatprep.subr.bf16.mxu0 0
        %1312 = vmatpush1.bf16.msra.mxu0 0
        %1313 = vmatprep.subr.bf16.mxu0 0
        %1314 = vmatpush1.bf16.msra.mxu0 0
        %1315 = vmatprep.subr.bf16.mxu0 0
        %1316 = vmatpush1.bf16.msra.mxu0 0
        %1317 = vmatprep.subr.bf16.mxu0 0
        %1318 = vmatpush1.bf16.msra.mxu0 0
        %1319 = vmatprep.subr.bf16.mxu0 0
        %1320 = vmatpush1.bf16.msra.mxu0 0
        %1321 = vmatprep.subr.bf16.mxu0 0
        %1322 = vmatpush1.bf16.msra.mxu0 0
        %1323 = vmatprep.subr.bf16.mxu0 0
        %1324 = vmatpush1.bf16.msra.mxu0 0
        %1325 = vmatprep.subr.bf16.mxu0 0
        %1326 = vmatpush1.bf16.msra.mxu0 0
        %1327 = vmatprep.subr.bf16.mxu0 0
        %1328 = vmatpush1.bf16.msra.mxu0 0
        %1329 = vmatprep.subr.bf16.mxu0 0
        %1330 = vmatpush1.bf16.msra.mxu0 0
        %1331 = vmatprep.subr.bf16.mxu0 0
        %1332 = vmatpush1.bf16.msra.mxu0 0
        %1333 = vmatprep.subr.bf16.mxu0 0
        %1334 = vmatpush1.bf16.msra.mxu0 0
        %1335 = vmatprep.mubr.bf16.mxu0 0
        %1336 = vmatmul.mubr.bf16.gmra.mrb[0].mxu0 %v1297
        %v1337 = vpop.f32.mrb[0].mxu0
        %v1338 = vadd.f32 0.0, %v1337
        %v1339 = vpop.f32.mrb[0].mxu0
        %v1340 = vpop.f32.mrb[0].mxu0
        %v1341 = vpop.f32.mrb[0].mxu0
        %1342 = vdwg.mxu0
        %v1344 = vsel %vm1060, %v1293, 0
        %v1347 = vsel %vm1299, %v1053, 0
        %1349 = vmatprep.subr.bf16.mxu0 0
        %1350 = vmatpush1.bf16.msra.mxu0 %v1347
        %1351 = vmatprep.subr.bf16.mxu0 0
        %1352 = vmatpush1.bf16.msra.mxu0 0
        %1353 = vmatprep.subr.bf16.mxu0 0
        %1354 = vmatpush1.bf16.msra.mxu0 0
        %1355 = vmatprep.subr.bf16.mxu0 0
        %1356 = vmatpush1.bf16.msra.mxu0 0
        %1357 = vmatprep.subr.bf16.mxu0 0
        %1358 = vmatpush1.bf16.msra.mxu0 0
        %1359 = vmatprep.subr.bf16.mxu0 0
        %1360 = vmatpush1.bf16.msra.mxu0 0
        %1361 = vmatprep.subr.bf16.mxu0 0
        %1362 = vmatpush1.bf16.msra.mxu0 0
        %1363 = vmatprep.subr.bf16.mxu0 0
        %1364 = vmatpush1.bf16.msra.mxu0 0
        %1365 = vmatprep.subr.bf16.mxu0 0
        %1366 = vmatpush1.bf16.msra.mxu0 0
        %1367 = vmatprep.subr.bf16.mxu0 0
        %1368 = vmatpush1.bf16.msra.mxu0 0
        %1369 = vmatprep.subr.bf16.mxu0 0
        %1370 = vmatpush1.bf16.msra.mxu0 0
        %1371 = vmatprep.subr.bf16.mxu0 0
        %1372 = vmatpush1.bf16.msra.mxu0 0
        %1373 = vmatprep.subr.bf16.mxu0 0
        %1374 = vmatpush1.bf16.msra.mxu0 0
        %1375 = vmatprep.subr.bf16.mxu0 0
        %1376 = vmatpush1.bf16.msra.mxu0 0
        %1377 = vmatprep.subr.bf16.mxu0 0
        %1378 = vmatpush1.bf16.msra.mxu0 0
        %1379 = vmatprep.subr.bf16.mxu0 0
        %1380 = vmatpush1.bf16.msra.mxu0 0
        %1381 = vmatprep.mubr.bf16.mxu0 0
        %1382 = vmatmul.mubr.bf16.gmra.mrb[0].mxu0 %v1344
        %v1383 = vpop.f32.mrb[0].mxu0
        %v1384 = vadd.f32 0.0, %v1383
        %v1385 = vpop.f32.mrb[0].mxu0
        %v1386 = vpop.f32.mrb[0].mxu0
        %v1387 = vpop.f32.mrb[0].mxu0
        %1388 = vdwg.mxu0
        %v1390 = vsel %vm1060, %v1294, 0
        %v1393 = vsel %vm1299, %v1056, 0
        %1395 = vmatprep.subr.bf16.mxu0 0
        %1396 = vmatpush1.bf16.msra.mxu0 %v1393
        %1397 = vmatprep.subr.bf16.mxu0 0
        %1398 = vmatpush1.bf16.msra.mxu0 0
        %1399 = vmatprep.subr.bf16.mxu0 0
        %1400 = vmatpush1.bf16.msra.mxu0 0
        %1401 = vmatprep.subr.bf16.mxu0 0
        %1402 = vmatpush1.bf16.msra.mxu0 0
        %1403 = vmatprep.subr.bf16.mxu0 0
        %1404 = vmatpush1.bf16.msra.mxu0 0
        %1405 = vmatprep.subr.bf16.mxu0 0
        %1406 = vmatpush1.bf16.msra.mxu0 0
        %1407 = vmatprep.subr.bf16.mxu0 0
        %1408 = vmatpush1.bf16.msra.mxu0 0
        %1409 = vmatprep.subr.bf16.mxu0 0
        %1410 = vmatpush1.bf16.msra.mxu0 0
        %1411 = vmatprep.subr.bf16.mxu0 0
        %1412 = vmatpush1.bf16.msra.mxu0 0
        %1413 = vmatprep.subr.bf16.mxu0 0
        %1414 = vmatpush1.bf16.msra.mxu0 0
        %1415 = vmatprep.subr.bf16.mxu0 0
        %1416 = vmatpush1.bf16.msra.mxu0 0
        %1417 = vmatprep.subr.bf16.mxu0 0
        %1418 = vmatpush1.bf16.msra.mxu0 0
        %1419 = vmatprep.subr.bf16.mxu0 0
        %1420 = vmatpush1.bf16.msra.mxu0 0
        %1421 = vmatprep.subr.bf16.mxu0 0
        %1422 = vmatpush1.bf16.msra.mxu0 0
        %1423 = vmatprep.subr.bf16.mxu0 0
        %1424 = vmatpush1.bf16.msra.mxu0 0
        %1425 = vmatprep.subr.bf16.mxu0 0
        %1426 = vmatpush1.bf16.msra.mxu0 0
        %1427 = vmatprep.mubr.bf16.mxu0 0
        %1428 = vmatmul.mubr.bf16.gmra.mrb[0].mxu0 %v1390
        %v1429 = vpop.f32.mrb[0].mxu0
        %v1430 = vadd.f32 0.0, %v1429
        %v1431 = vpop.f32.mrb[0].mxu0
        %v1432 = vpop.f32.mrb[0].mxu0
        %v1433 = vpop.f32.mrb[0].mxu0
        %1434 = vdwg.mxu0
        %v1436 = vsel %vm1060, %v1295, 0
        %v1439 = vsel %vm1299, %v1059, 0
        %1441 = vmatprep.subr.bf16.mxu0 0
        %1442 = vmatpush1.bf16.msra.mxu0 %v1439
        %1443 = vmatprep.subr.bf16.mxu0 0
        %1444 = vmatpush1.bf16.msra.mxu0 0
        %1445 = vmatprep.subr.bf16.mxu0 0
        %1446 = vmatpush1.bf16.msra.mxu0 0
        %1447 = vmatprep.subr.bf16.mxu0 0
        %1448 = vmatpush1.bf16.msra.mxu0 0
        %1449 = vmatprep.subr.bf16.mxu0 0
        %1450 = vmatpush1.bf16.msra.mxu0 0
        %1451 = vmatprep.subr.bf16.mxu0 0
        %1452 = vmatpush1.bf16.msra.mxu0 0
        %1453 = vmatprep.subr.bf16.mxu0 0
        %1454 = vmatpush1.bf16.msra.mxu0 0
        %1455 = vmatprep.subr.bf16.mxu0 0
        %1456 = vmatpush1.bf16.msra.mxu0 0
        %1457 = vmatprep.subr.bf16.mxu0 0
        %1458 = vmatpush1.bf16.msra.mxu0 0
        %1459 = vmatprep.subr.bf16.mxu0 0
        %1460 = vmatpush1.bf16.msra.mxu0 0
        %1461 = vmatprep.subr.bf16.mxu0 0
        %1462 = vmatpush1.bf16.msra.mxu0 0
        %1463 = vmatprep.subr.bf16.mxu0 0
        %1464 = vmatpush1.bf16.msra.mxu0 0
        %1465 = vmatprep.subr.bf16.mxu0 0
        %1466 = vmatpush1.bf16.msra.mxu0 0
        %1467 = vmatprep.subr.bf16.mxu0 0
        %1468 = vmatpush1.bf16.msra.mxu0 0
        %1469 = vmatprep.subr.bf16.mxu0 0
        %1470 = vmatpush1.bf16.msra.mxu0 0
        %1471 = vmatprep.subr.bf16.mxu0 0
        %1472 = vmatpush1.bf16.msra.mxu0 0
        %1473 = vmatprep.mubr.bf16.mxu0 0
        %1474 = vmatmul.mubr.bf16.gmra.mrb[0].mxu0 %v1436
        %v1475 = vpop.f32.mrb[0].mxu0
        %v1476 = vadd.f32 0.0, %v1475
        %v1477 = vpop.f32.mrb[0].mxu0
        %v1478 = vpop.f32.mrb[0].mxu0
        %v1479 = vpop.f32.mrb[0].mxu0
        %1480 = vdwg.mxu0
        %v1481 = vrcp.pop %v1282
        %v1482 = vmul.f32 1.0, %v1481
        %v1483 = vrcp.pop %v1285
        %v1484 = vmul.f32 1.0, %v1483
        %v1485 = vrcp.pop %v1288
        %v1486 = vmul.f32 1.0, %v1485
        %v1487 = vrcp.pop %v1291
        %v1488 = vmul.f32 1.0, %v1487
        %v1489 = vmul.f32 %v1338, %v1482
        %v1490 = vmul.f32 %v1384, %v1484
        %v1491 = vmul.f32 %v1430, %v1486
        %v1492 = vmul.f32 %v1476, %v1488
        %v1493 = vpack.c.bf16 %v1489, %v1489
        %v1495 = vunpack.c.l.s4 1983009808
        %v1496 = vunpack.c.0.s8 %v1495
        %v1497 = vlaneseq
        %v1498 = vshrl.u32 %v1497, 7
        %v1499 = vsub.s32 %v1496, %v1498
        %v1500 = vrot.slane %v1493, %v1499
        %v1501 = vpack.c.bf16 %v1491, %v1491
        %v1503 = vunpack.c.l.s4 1983009808
        %v1504 = vunpack.c.0.s8 %v1503
        %v1505 = vlaneseq
        %v1506 = vshrl.u32 %v1505, 7
        %v1507 = vsub.s32 %v1504, %v1506
        %v1508 = vrot.slane %v1501, %v1507
        %v1509 = vcombine.low %v1500, %v1508
        %v1510 = vcombine.high %v1500, %v1508
        %v1512 = vunpack.c.l.s4 1934713408
        %v1513 = vunpack.c.0.s8 %v1512
        %v1514 = vlaneseq
        %v1515 = vshrl.u32 %v1514, 7
        %v1516 = vsub.s32 %v1513, %v1515
        %v1517 = vrot.slane %v1509, %v1516
        %v1519 = vunpack.c.l.s4 1934713408
        %v1520 = vunpack.c.0.s8 %v1519
        %v1521 = vlaneseq
        %v1522 = vshrl.u32 %v1521, 7
        %v1523 = vsub.s32 %v1520, %v1522
        %v1524 = vrot.slane %v1510, %v1523
        %v1525 = vcombine.high %v1517, 0
        %v1526 = vcombine.high %v1524, 0
        %v1527 = vpack.c.bf16 %v1490, %v1490
        %v1529 = vunpack.c.l.s4 1983009808
        %v1530 = vunpack.c.0.s8 %v1529
        %v1531 = vlaneseq
        %v1532 = vshrl.u32 %v1531, 7
        %v1533 = vsub.s32 %v1530, %v1532
        %v1534 = vrot.slane %v1527, %v1533
        %v1535 = vpack.c.bf16 %v1492, %v1492
        %v1537 = vunpack.c.l.s4 1983009808
        %v1538 = vunpack.c.0.s8 %v1537
        %v1539 = vlaneseq
        %v1540 = vshrl.u32 %v1539, 7
        %v1541 = vsub.s32 %v1538, %v1540
        %v1542 = vrot.slane %v1535, %v1541
        %v1543 = vcombine.low %v1534, %v1542
        %v1544 = vcombine.high %v1534, %v1542
        %v1546 = vunpack.c.l.s4 1934713408
        %v1547 = vunpack.c.0.s8 %v1546
        %v1548 = vlaneseq
        %v1549 = vshrl.u32 %v1548, 7
        %v1550 = vsub.s32 %v1547, %v1549
        %v1551 = vrot.slane %v1543, %v1550
        %v1553 = vunpack.c.l.s4 1934713408
        %v1554 = vunpack.c.0.s8 %v1553
        %v1555 = vlaneseq
        %v1556 = vshrl.u32 %v1555, 7
        %v1557 = vsub.s32 %v1554, %v1556
        %v1558 = vrot.slane %v1544, %v1557
        %v1559 = vcombine.high %v1551, 0
        %v1560 = vcombine.high %v1558, 0
        %v1563 = vpack.i.b16 %v1551, %v1517
        %v1565 = vshrl.u32 %v1517, 16
        %v1566 = vshrl.u32 %v1551, 16
        %v1567 = vpack.i.b16 %v1566, %v1565
        %v1571 = vpack.i.b16 %v1559, %v1525
        %v1573 = vshrl.u32 %v1525, 16
        %v1574 = vshrl.u32 %v1559, 16
        %v1575 = vpack.i.b16 %v1574, %v1573
        %v1579 = vpack.i.b16 %v1558, %v1524
        %v1581 = vshrl.u32 %v1524, 16
        %v1582 = vshrl.u32 %v1558, 16
        %v1583 = vpack.i.b16 %v1582, %v1581
        %v1587 = vpack.i.b16 %v1560, %v1526
        %v1589 = vshrl.u32 %v1526, 16
        %v1590 = vshrl.u32 %v1560, 16
        %v1591 = vpack.i.b16 %v1590, %v1589
        %v1593 = vcombine.low %v1563, %v1579
        %v1595 = vunpack.c.l.s4 1983009808
        %v1596 = vunpack.c.0.s8 %v1595
        %v1597 = vlaneseq
        %v1598 = vshrl.u32 %v1597, 7
        %v1599 = vsub.s32 %v1596, %v1598
        %v1600 = vrot.slane %v1593, %v1599
        %v1601 = vcombine.low %v1571, %v1587
        %v1603 = vunpack.c.l.s4 1983009808
        %v1604 = vunpack.c.0.s8 %v1603
        %v1605 = vlaneseq
        %v1606 = vshrl.u32 %v1605, 7
        %v1607 = vsub.s32 %v1604, %v1606
        %v1608 = vrot.slane %v1601, %v1607
        %v1609 = vcombine.low %v1600, %v1608
        %v1611 = vunpack.c.l.s4 1934713408
        %v1612 = vunpack.c.0.s8 %v1611
        %v1613 = vlaneseq
        %v1614 = vshrl.u32 %v1613, 7
        %v1615 = vsub.s32 %v1612, %v1614
        %v1616 = vrot.slane %v1609, %v1615
        %v1617 = vcombine.high %v1616, 0
        %v1618 = vcombine.low %v1567, %v1583
        %v1620 = vunpack.c.l.s4 1983009808
        %v1621 = vunpack.c.0.s8 %v1620
        %v1622 = vlaneseq
        %v1623 = vshrl.u32 %v1622, 7
        %v1624 = vsub.s32 %v1621, %v1623
        %v1625 = vrot.slane %v1618, %v1624
        %v1626 = vcombine.low %v1575, %v1591
        %v1628 = vunpack.c.l.s4 1983009808
        %v1629 = vunpack.c.0.s8 %v1628
        %v1630 = vlaneseq
        %v1631 = vshrl.u32 %v1630, 7
        %v1632 = vsub.s32 %v1629, %v1631
        %v1633 = vrot.slane %v1626, %v1632
        %v1634 = vcombine.low %v1625, %v1633
        %v1636 = vunpack.c.l.s4 1934713408
        %v1637 = vunpack.c.0.s8 %v1636
        %v1638 = vlaneseq
        %v1639 = vshrl.u32 %v1638, 7
        %v1640 = vsub.s32 %v1637, %v1639
        %v1641 = vrot.slane %v1634, %v1640
        %v1642 = vcombine.high %v1641, 0
        %v1645 = vpack.i.b16 %v1641, %v1616
        %v1646 = vshrl.u32 %v1616, 16
        %v1647 = vshrl.u32 %v1641, 16
        %v1648 = vpack.i.b16 %v1647, %v1646
        %v1651 = vpack.i.b16 %v1642, %v1617
        %v1652 = vshrl.u32 %v1617, 16
        %v1653 = vshrl.u32 %v1642, 16
        %v1654 = vpack.i.b16 %v1653, %v1652
        %1655 = vrot.lane.b32.xlu0 %v1648, 8
        %v1656 = vpop.permute.xlu0 %1655
        %1657 = vrot.lane.b32.xlu0 %v1651, 16
        %v1658 = vpop.permute.xlu0 %1657
        %1659 = vrot.lane.b32.xlu0 %v1654, 24
        %v1660 = vpop.permute.xlu0 %1659
        %v1663 = vsel %vm1060, %v1645, %v1656
        %vm1664 = vcmask 130048
        %v1666 = vsel %vm1664, %v1663, %v1658
        %vm1667 = vcmask 195584
        %v1669 = vsel %vm1667, %v1666, %v1660
        %v1670 = vld [vmem:[#allocation5] sm:$0xf]
        %v1671 = vld [vmem:[#allocation5 + $0x4] sm:$0xf]
        %v1672 = vld [vmem:[#allocation5 + $0x8] sm:$0xf]
        %v1673 = vld [vmem:[#allocation5 + $0xc] sm:$0xf]
        %v1674 = vld [vmem:[%s8] sm:$0x1]
        %v1676 = vlaneseq
        %v1677 = vshrl.u32 %v1676, 7
        %v1678 = vsub.s32 0, %v1677
        %v1679 = vrot.slane %v1674, %v1678
        %v1685 = vunpack.c.l.b16 %v1670
        %v1686 = vunpack.c.l.b16 %v1671
        %v1687 = vunpack.c.l.b16 %v1672
        %v1688 = vunpack.c.l.b16 %v1673
        %v1689 = vpack.c.b16 %v1686, %v1685
        %v1690 = vpack.c.b16 %v1688, %v1687
        %v1693 = vsel %vm383, %v1669, 0
        %1695 = vmatprep.subr.bf16.mxu0 0
        %1696 = vmatpush1.bf16.msra.mxu0 %v1689
        %1697 = vmatprep.subr.bf16.mxu0 0
        %1698 = vmatpush1.bf16.msra.mxu0 %v1690
        %1699 = vmatprep.subr.bf16.mxu0 0
        %1700 = vmatpush1.bf16.msra.mxu0 0
        %1701 = vmatprep.subr.bf16.mxu0 0
        %1702 = vmatpush1.bf16.msra.mxu0 0
        %1703 = vmatprep.subr.bf16.mxu0 0
        %1704 = vmatpush1.bf16.msra.mxu0 0
        %1705 = vmatprep.subr.bf16.mxu0 0
        %1706 = vmatpush1.bf16.msra.mxu0 0
        %1707 = vmatprep.subr.bf16.mxu0 0
        %1708 = vmatpush1.bf16.msra.mxu0 0
        %1709 = vmatprep.subr.bf16.mxu0 0
        %1710 = vmatpush1.bf16.msra.mxu0 0
        %1711 = vmatprep.subr.bf16.mxu0 0
        %1712 = vmatpush1.bf16.msra.mxu0 0
        %1713 = vmatprep.subr.bf16.mxu0 0
        %1714 = vmatpush1.bf16.msra.mxu0 0
        %1715 = vmatprep.subr.bf16.mxu0 0
        %1716 = vmatpush1.bf16.msra.mxu0 0
        %1717 = vmatprep.subr.bf16.mxu0 0
        %1718 = vmatpush1.bf16.msra.mxu0 0
        %1719 = vmatprep.subr.bf16.mxu0 0
        %1720 = vmatpush1.bf16.msra.mxu0 0
        %1721 = vmatprep.subr.bf16.mxu0 0
        %1722 = vmatpush1.bf16.msra.mxu0 0
        %1723 = vmatprep.subr.bf16.mxu0 0
        %1724 = vmatpush1.bf16.msra.mxu0 0
        %1725 = vmatprep.subr.bf16.mxu0 0
        %1726 = vmatpush1.bf16.msra.mxu0 0
        %1727 = vmatprep.mubr.bf16.mxu0 0
        %1728 = vmatmul.mubr.bf16.gmra.mrb[0].mxu0 %v1693
        %v1729 = vpop.f32.mrb[0].mxu0
        %v1730 = vadd.f32 %v1679, %v1729
        %v1731 = vpop.f32.mrb[0].mxu0
        %v1732 = vpop.f32.mrb[0].mxu0
        %v1733 = vpop.f32.mrb[0].mxu0
        %1734 = vdwg.mxu0
        %1735 = vst.msk [vmem:[%s353] sm:$0xff] %vm383, %v1730
        %s1736 = sand.u32 %s227, 1
        %s1737 = scalar_lea.sflag [#allocation4], %s1736
        %s1738 = sand.u32 %s227, 1
        %s1739 = smul.addr %s1738, 8
        %s1740 = scalar_lea.vmem [#allocation7], %s1739
        // Predicated region
        $region65: #{_forward.1} parent=55 // pred_check
          %p1741 = pneg %p237
        $region66: #{_forward.1} parent=55 // pred_check_branch
          %1743 = sbr.rel (%p1741) target = $region68
        $region67: #{_forward.1} parent=55 // pred_region
          %s1745 = ssub.s32 128, 128
          %1746 = vsyncadd %s1737, %s1745
          %s1747 = smul.addr %s25, 128
          %s1748 = scalar_lea.hbm %s9, %s1747
          %s1750 = sshll.u32 %s1740, 4
          %s1751 = int_to_ptr.vmem [resolvable:$true] %s1750
          %1753 = dma.vmem_to_hbm [thread:$0]  %s1751, 128, %s1748, %s1737
        $region68: #{_forward.1} parent=55 // pred_fallthru
          _
      $region56: #{_forward.1} parent=5 // pred_fallthru
        _
      %p1754 = scmp.le.s32.totalorder 2, %s20
      // Predicated region
      $region69: #{_forward.1} parent=5 // pred_check
        %p1755 = pneg %p1754
      $region70: #{_forward.1} parent=5 // pred_check_branch
        %1757 = sbr.rel (%p1755) target = $region72
      $region71: #{_forward.1} parent=5 // pred_region
        %s1758 = ssub.s32 %s20, 2
        // Predicated region
        $region73: #{_forward.1} parent=71 // pred_check
          %p1759 = pneg %p243
        $region74: #{_forward.1} parent=71 // pred_check_branch
          %1761 = sbr.rel (%p1759) target = $region76
        $region75: #{_forward.1} parent=71 // pred_region
          %s1762 = sand.u32 %s228, 1
          %s1763 = scalar_lea.sflag [#allocation4], %s1762
          %s1764 = sand.u32 %s228, 1
          %s1765 = smul.addr %s1764, 8
          %s1766 = scalar_lea.vmem [#allocation7], %s1765
          %1767 = dma.done %s1763, 128
        $region76: #{_forward.1} parent=71 // pred_fallthru
          _
      $region72: #{_forward.1} parent=5 // pred_fallthru
        _
    $region6: #{_forward.1} parent=1 // loop_footer
      %s24 = sadd.s32 1, %s20
    $region7: #{_forward.1} parent=1 // loop_footer_branch
      %19 = sbr.rel target = $region3
    $region8: #{_forward.1} parent=1 // loop_exit
      _
    %1768 = vsyncpa [#allocation3], 1
    %s1769 = scalar_lea.sflag [#allocation3], 1
    %1770 = vsyncpa %s1769, 1
    %1771 = vsyncpa [#allocation6], 1
    %1772 = vsyncpa [#allocation4], 1
    %s1773 = scalar_lea.sflag [#allocation4], 1
    %1774 = vsyncpa %s1773, 1

</llo_original>
